<compile_context>
chip_gen: v7x
topology: tpu7x:2x2x1
jax: 0.10.0
libtpu: 0.0.40
codegen_flags: <defaults>
</compile_context>

<pallas_src>
import numpy as np

import jax
import jax.numpy as jnp
from jax.experimental import pallas as pl
from jax.experimental.pallas import tpu as pltpu


def _round_up(x, m):
    return (x + m - 1) // m * m


def _textcnn_kernel(x_ref, wk_ref, bm_ref, fcw_ref, fcb_ref, out_ref):
    tb, s_pad, e = x_ref.shape
    max_fs, _, c_pad = wk_ref.shape
    n_rows = tb * s_pad

    # ---- conv as per-tap lane-dense matmuls on the flattened (B*S, E) tile ----
    x2 = x_ref[...].reshape(n_rows, e)                        # (TILE_B*S, E)
    # 32-bit view for the sublane rolls (sublane rotation of packed bf16 by odd
    # shifts is not a safe lowering); still far less XLU data than rolling the
    # (n_rows, c_pad) f32 product, and a no-op when compute dtype is f32.
    x_roll_src = x2.astype(jnp.float32)

    acc = jnp.dot(x2, wk_ref[0], preferred_element_type=jnp.float32)   # tap k = 0
    for k in range(1, max_fs):
        # Row (b, t) of the conv needs the tap-k input row (b, t + k): a sublane
        # roll on the XLU.  Rows that wrap across batch elements / the tile edge
        # only feed time steps t >= s_pad - k >= S - fs_i + 1 (for every k with a
        # nonzero weight column, i.e. k < fs_i), and those time steps are killed
        # by the -1e30 mask folded into bm_ref before the max-pool.  Taps with
        # k >= fs_i have all-zero weight columns for filter i.
        xk = pltpu.roll(x_roll_src, shift=n_rows - k, axis=0).astype(x2.dtype)
        acc = acc + jnp.dot(xk, wk_ref[k], preferred_element_type=jnp.float32)

    # ---- + (bias + mask) once, max-over-time, ReLU after the max ----
    conv = acc.reshape(tb, s_pad, c_pad) + bm_ref[...][None]
    pooled = jnp.maximum(jnp.max(conv, axis=1), 0.0)          # (TILE_B, C_pad)

    # ---- FC: one batched matmul + one dense 128-lane store ----
    y = jnp.dot(pooled.astype(fcw_ref.dtype), fcw_ref[...],
                preferred_element_type=jnp.float32)
    out_ref[...] = (y + fcb_ref[...]).astype(out_ref.dtype)


def _vmem_budget_and_limit():
    """Generation-aware VMEM sizing: ~104/112 MiB on 128-MiB parts (v5e/v6e),
    ~40/48 MiB on 64-MiB parts (v7x)."""
    mib = 1024 * 1024
    cap = 64 * mib
    try:
        cap = int(getattr(pltpu.get_tpu_info(), "vmem_capacity_bytes", cap)) or cap
    except Exception:
        pass
    limit = min(max(cap - 16 * mib, 32 * mib), 120 * mib)
    return limit - 8 * mib, limit


def _pick_tile_b(B, s_pad, E, c_pad, out_pad, act_bytes, max_fs,
                 vmem_budget_bytes, max_tile_b=1024):
    """Largest multiple-of-8 batch tile whose working set fits the VMEM budget,
    additionally capped so the parallel grid has >= 2 steps when padded B > 8
    (v7x has 2 TensorCores)."""
    e_vmem = _round_up(E, 128)                      # an (s, E) tile occupies 128 lanes
    fixed = (max_fs * E * c_pad * act_bytes         # stacked per-tap conv weights
             + s_pad * c_pad * 4                    # bias + mask (f32)
             + out_pad * 4                          # fc bias (f32)
             + c_pad * out_pad * act_bytes)         # fc weight
    per_row = (2 * s_pad * e_vmem * act_bytes       # double-buffered x tile
               + s_pad * e_vmem * 4                 # 32-bit roll source copy
               + s_pad * e_vmem * act_bytes         # rolled tap copy
               + 4 * s_pad * c_pad * 4              # wide f32 acc / temporaries
               + 2 * out_pad * 4)                   # double-buffered output tile
    avail = max(vmem_budget_bytes - fixed, 8 * per_row)
    tile = max(8, (int(avail // per_row) // 8) * 8)
    b8 = _round_up(B, 8)
    tile = min(tile, max_tile_b, b8)
    if b8 >= 16:                                    # keep >= 2 parallel grid steps
        tile = min(tile, _round_up(b8 // 2, 8))
    return tile


def textcnn_forward(x, conv_ws, conv_bs, fc_w, fc_b, filter_sizes,
                    *, compute_dtype=jnp.bfloat16):
    """x: (B, S, E). conv_ws[i]: (F, E, fs_i) [PyTorch Conv1d layout]. fc_w: (out, in)."""
    B, S, E = x.shape
    F = conv_ws[0].shape[0]
    nfs = len(filter_sizes)
    out_dim = fc_w.shape[0]
    max_fs = max(filter_sizes)
    if max_fs > S:
        # Also guarantees every filter has >= 1 unmasked time step, which is what
        # makes the ReLU-after-max fusion and the roll trick valid.
        raise ValueError(f"filter size {max_fs} larger than sequence length {S}")

    C = nfs * F
    c_pad = _round_up(C, 128)       # lane-dense filter axis
    out_pad = _round_up(out_dim, 128)
    s_pad = _round_up(S, 16)        # sublane-friendly for both f32 (8) and bf16 (16)
    assert s_pad >= S

    act_bytes = jnp.dtype(compute_dtype).itemsize
    vmem_budget, vmem_limit = _vmem_budget_and_limit()
    tile_b = _pick_tile_b(B, s_pad, E, c_pad, out_pad, act_bytes, max_fs, vmem_budget)
    b_pad = _round_up(B, tile_b)

    # ---- parameter re-layout (host side, one time) ----
    # W_k[e, i*F + f] = conv_ws[i][f, e, k]   (zero when k >= fs_i or in lane pad)
    # bm[t, i*F + f]  = conv bias, overwritten with -1e30 for every invalid conv
    #                   position t > S - fs_i INCLUDING the s_pad padding rows --
    #                   this invariant is what makes the in-kernel roll wrap safe.
    #                   (-1e30 is a finite sentinel; fine while |conv+bias| << 1e30.)
    wk_np = np.zeros((max_fs, E, c_pad), np.float32)
    bm_np = np.zeros((s_pad, c_pad), np.float32)
    for i, fs in enumerate(filter_sizes):
        col = slice(i * F, (i + 1) * F)
        bm_np[:, col] = np.asarray(conv_bs[i], np.float32)[None, :]
        bm_np[S - fs + 1:, col] = -1e30
        w = np.asarray(conv_ws[i], np.float32)            # (F, E, fs)
        for k in range(fs):
            wk_np[k, :, col] = w[:, :, k].T

    fcw_np = np.zeros((c_pad, out_pad), np.float32)
    fcw_np[:C, :out_dim] = np.asarray(fc_w, np.float32).T
    fcb_np = np.zeros((1, out_pad), np.float32)
    fcb_np[0, :out_dim] = np.asarray(fc_b, np.float32)

    wk = jnp.asarray(wk_np).astype(compute_dtype)
    bm = jnp.asarray(bm_np)                                # stays f32
    fcw = jnp.asarray(fcw_np).astype(compute_dtype)
    fcb = jnp.asarray(fcb_np)                              # stays f32

    x_p = jnp.pad(x.astype(compute_dtype),
                  ((0, b_pad - B), (0, s_pad - S), (0, 0)))

    out = pl.pallas_call(
        _textcnn_kernel,
        out_shape=jax.ShapeDtypeStruct((b_pad, out_pad), jnp.float32),
        grid=(b_pad // tile_b,),
        in_specs=[
            pl.BlockSpec((tile_b, s_pad, E), lambda b: (b, 0, 0)),   # activations
            pl.BlockSpec((max_fs, E, c_pad), lambda b: (0, 0, 0)),   # per-tap conv W
            pl.BlockSpec((s_pad, c_pad), lambda b: (0, 0)),          # bias + mask
            pl.BlockSpec((c_pad, out_pad), lambda b: (0, 0)),        # fc weight
            pl.BlockSpec((1, out_pad), lambda b: (0, 0)),            # fc bias
        ],
        out_specs=pl.BlockSpec((tile_b, out_pad), lambda b: (b, 0)),
        compiler_params=pltpu.CompilerParams(
            dimension_semantics=("parallel",),
            vmem_limit_bytes=vmem_limit),
    )(x_p, wk, bm, fcw, fcb)

    return out[:B, :out_dim]


def ref_forward(x, conv_ws, conv_bs, fc_w, fc_b, filter_sizes):
    """Pure-JAX reference mirroring the PyTorch forward."""
    emb = jnp.transpose(x, (0, 2, 1))  # (B, E, S)  == x.permute(0, 2, 1)
    pooled = []
    for w, b in zip(conv_ws, conv_bs):
        out = jax.lax.conv_general_dilated(
            emb, w, window_strides=(1,), padding='VALID',
            dimension_numbers=('NCH', 'OIH', 'NCH'))
        out = jax.nn.relu(out + b[None, :, None])
        pooled.append(jnp.max(out, axis=2))
    cat = jnp.concatenate(pooled, axis=1)
    return cat @ fc_w.T + fc_b


if __name__ == "__main__":
    batch, seq_len = 2, 16
    embedding_dim, n_filters = 32, 8
    filter_sizes = (3, 4, 5)
    output_dim = 4

    key = jax.random.PRNGKey(0)
    keys = jax.random.split(key, 2 + len(filter_sizes))

    # Input: (batch, seq_len, embedding_dim)
    x = jax.random.normal(keys[0], (batch, seq_len, embedding_dim), jnp.float32)

    # Conv params: xavier_uniform weights, bias = 0.1 (as in Conv1d.init_params).
    conv_ws, conv_bs = [], []
    for i, fs in enumerate(filter_sizes):
        fan_in = embedding_dim * fs
        fan_out = n_filters * fs
        bound = (6.0 / (fan_in + fan_out)) ** 0.5
        w = jax.random.uniform(keys[1 + i], (n_filters, embedding_dim, fs),
                               jnp.float32, minval=-bound, maxval=bound)
        conv_ws.append(w)
        conv_bs.append(jnp.full((n_filters,), 0.1, jnp.float32))

    # FC params: kaiming_normal weight, bias = 0 (as in Linear.init_params).
    in_feat = len(filter_sizes) * n_filters
    std = (2.0 / in_feat) ** 0.5
    fc_w = std * jax.random.normal(keys[-1], (output_dim, in_feat), jnp.float32)
    fc_b = jnp.zeros((output_dim,), jnp.float32)

    ref = ref_forward(x, conv_ws, conv_bs, fc_w, fc_b, filter_sizes)

    # f32 compute path: tight tolerance vs the XLA reference.
    out_f32 = jax.block_until_ready(
        textcnn_forward(x, conv_ws, conv_bs, fc_w, fc_b, filter_sizes,
                        compute_dtype=jnp.float32))
    assert out_f32.shape == (batch, output_dim)
    assert jnp.allclose(out_f32, ref, atol=1e-3, rtol=1e-3), (out_f32, ref)

    # bf16 activations/weights (the default path on all generations): f32
    # accumulation, bf16 input rounding -> looser tolerance.
    out_bf16 = jax.block_until_ready(
        textcnn_forward(x, conv_ws, conv_bs, fc_w, fc_b, filter_sizes,
                        compute_dtype=jnp.bfloat16))
    assert out_bf16.shape == (batch, output_dim)
    assert jnp.allclose(out_bf16, ref, atol=2e-1, rtol=1e-1), (out_bf16, ref)

    print("KERNEL_OK")
</pallas_src>

<mosaic_0001>
module attributes {stable_mosaic.version = 11 : i64} {
  func.func @_textcnn_kernel(%arg0: i32, %arg1: memref<8x16x32xf32, #tpu.memory_space<vmem>>, %arg2: memref<5x32x128xf32, #tpu.memory_space<vmem>>, %arg3: memref<16x128xf32, #tpu.memory_space<vmem>>, %arg4: memref<128x128xf32, #tpu.memory_space<vmem>>, %arg5: memref<1x128xf32, #tpu.memory_space<vmem>>, %arg6: memref<8x128xf32, #tpu.memory_space<vmem>>) attributes {dimension_semantics = [#tpu.dimension_semantics<parallel>], iteration_bounds = array<i64: 1>, scalar_prefetch = 0 : i64, scratch_operands = 0 : i64, tpu.core_type = #tpu.core_type<tc>, window_params = [{transform_indices = @transform_0, window_bounds = array<i64: 8, 16, 32>}, {pipeline_mode = #tpu.pipeline_mode<synchronous>, transform_indices = @transform_1, window_bounds = array<i64: 5, 32, 128>}, {pipeline_mode = #tpu.pipeline_mode<synchronous>, transform_indices = @transform_2, window_bounds = array<i64: 16, 128>}, {pipeline_mode = #tpu.pipeline_mode<synchronous>, transform_indices = @transform_3, window_bounds = array<i64: 128, 128>}, {pipeline_mode = #tpu.pipeline_mode<synchronous>, transform_indices = @transform_4, window_bounds = array<i64: 1, 128>}, {transform_indices = @transform_5, window_bounds = array<i64: 8, 128>}]} {
    %c0 = arith.constant 0 : index
    %c0_0 = arith.constant 0 : index
    %c0_1 = arith.constant 0 : index
    %0 = vector.load %arg1[%c0, %c0_0, %c0_1] : memref<8x16x32xf32, #tpu.memory_space<vmem>>, vector<8x16x32xf32>
    %1 = vector.shape_cast %0 : vector<8x16x32xf32> to vector<128x32xf32>
    %c0_2 = arith.constant 0 : index
    %c0_3 = arith.constant 0 : index
    %c0_4 = arith.constant 0 : index
    %2 = vector.load %arg2[%c0_2, %c0_3, %c0_4] : memref<5x32x128xf32, #tpu.memory_space<vmem>>, vector<1x32x128xf32>
    %3 = vector.shape_cast %2 : vector<1x32x128xf32> to vector<32x128xf32>
    %cst = arith.constant dense<0.000000e+00> : vector<128x128xf32>
    %4 = tpu.matmul %1, %3, %cst {dimension_numbers = #tpu.dot_dimension_numbers<[1], [0], [0], [1], [0, 0, 1, 1], [], []>} : vector<128x32xf32>, vector<32x128xf32>, vector<128x128xf32> -> vector<128x128xf32>
    %c127_i32 = arith.constant 127 : i32
    %5 = tpu.dynamic_rotate %1 by %c127_i32 dim 0 : vector<128x32xf32>, i32 -> vector<128x32xf32>
    %c1 = arith.constant 1 : index
    %c0_5 = arith.constant 0 : index
    %c0_6 = arith.constant 0 : index
    %6 = vector.load %arg2[%c1, %c0_5, %c0_6] : memref<5x32x128xf32, #tpu.memory_space<vmem>>, vector<1x32x128xf32>
    %7 = vector.shape_cast %6 : vector<1x32x128xf32> to vector<32x128xf32>
    %cst_7 = arith.constant dense<0.000000e+00> : vector<128x128xf32>
    %8 = tpu.matmul %5, %7, %cst_7 {dimension_numbers = #tpu.dot_dimension_numbers<[1], [0], [0], [1], [0, 0, 1, 1], [], []>} : vector<128x32xf32>, vector<32x128xf32>, vector<128x128xf32> -> vector<128x128xf32>
    %9 = arith.addf %4, %8 : vector<128x128xf32>
    %c126_i32 = arith.constant 126 : i32
    %10 = tpu.dynamic_rotate %1 by %c126_i32 dim 0 : vector<128x32xf32>, i32 -> vector<128x32xf32>
    %c2 = arith.constant 2 : index
    %c0_8 = arith.constant 0 : index
    %c0_9 = arith.constant 0 : index
    %11 = vector.load %arg2[%c2, %c0_8, %c0_9] : memref<5x32x128xf32, #tpu.memory_space<vmem>>, vector<1x32x128xf32>
    %12 = vector.shape_cast %11 : vector<1x32x128xf32> to vector<32x128xf32>
    %cst_10 = arith.constant dense<0.000000e+00> : vector<128x128xf32>
    %13 = tpu.matmul %10, %12, %cst_10 {dimension_numbers = #tpu.dot_dimension_numbers<[1], [0], [0], [1], [0, 0, 1, 1], [], []>} : vector<128x32xf32>, vector<32x128xf32>, vector<128x128xf32> -> vector<128x128xf32>
    %14 = arith.addf %9, %13 : vector<128x128xf32>
    %c125_i32 = arith.constant 125 : i32
    %15 = tpu.dynamic_rotate %1 by %c125_i32 dim 0 : vector<128x32xf32>, i32 -> vector<128x32xf32>
    %c3 = arith.constant 3 : index
    %c0_11 = arith.constant 0 : index
    %c0_12 = arith.constant 0 : index
    %16 = vector.load %arg2[%c3, %c0_11, %c0_12] : memref<5x32x128xf32, #tpu.memory_space<vmem>>, vector<1x32x128xf32>
    %17 = vector.shape_cast %16 : vector<1x32x128xf32> to vector<32x128xf32>
    %cst_13 = arith.constant dense<0.000000e+00> : vector<128x128xf32>
    %18 = tpu.matmul %15, %17, %cst_13 {dimension_numbers = #tpu.dot_dimension_numbers<[1], [0], [0], [1], [0, 0, 1, 1], [], []>} : vector<128x32xf32>, vector<32x128xf32>, vector<128x128xf32> -> vector<128x128xf32>
    %19 = arith.addf %14, %18 : vector<128x128xf32>
    %c124_i32 = arith.constant 124 : i32
    %20 = tpu.dynamic_rotate %1 by %c124_i32 dim 0 : vector<128x32xf32>, i32 -> vector<128x32xf32>
    %c4 = arith.constant 4 : index
    %c0_14 = arith.constant 0 : index
    %c0_15 = arith.constant 0 : index
    %21 = vector.load %arg2[%c4, %c0_14, %c0_15] : memref<5x32x128xf32, #tpu.memory_space<vmem>>, vector<1x32x128xf32>
    %22 = vector.shape_cast %21 : vector<1x32x128xf32> to vector<32x128xf32>
    %cst_16 = arith.constant dense<0.000000e+00> : vector<128x128xf32>
    %23 = tpu.matmul %20, %22, %cst_16 {dimension_numbers = #tpu.dot_dimension_numbers<[1], [0], [0], [1], [0, 0, 1, 1], [], []>} : vector<128x32xf32>, vector<32x128xf32>, vector<128x128xf32> -> vector<128x128xf32>
    %24 = arith.addf %19, %23 : vector<128x128xf32>
    %25 = vector.shape_cast %24 : vector<128x128xf32> to vector<8x16x128xf32>
    %c0_17 = arith.constant 0 : index
    %c0_18 = arith.constant 0 : index
    %26 = vector.load %arg3[%c0_17, %c0_18] : memref<16x128xf32, #tpu.memory_space<vmem>>, vector<16x128xf32>
    %27 = vector.shape_cast %26 : vector<16x128xf32> to vector<1x16x128xf32>
    %28 = vector.broadcast %27 : vector<1x16x128xf32> to vector<8x16x128xf32>
    %29 = arith.addf %25, %28 : vector<8x16x128xf32>
    %cst_19 = arith.constant dense<0xFF800000> : vector<8x128xf32>
    %30 = vector.multi_reduction <maximumf>, %29, %cst_19 [1] : vector<8x16x128xf32> to vector<8x128xf32>
    %cst_20 = arith.constant 0.000000e+00 : f32
    %31 = vector.broadcast %cst_20 : f32 to vector<8x128xf32>
    %32 = arith.maximumf %30, %31 : vector<8x128xf32>
    %c0_21 = arith.constant 0 : index
    %c0_22 = arith.constant 0 : index
    %33 = vector.load %arg4[%c0_21, %c0_22] : memref<128x128xf32, #tpu.memory_space<vmem>>, vector<128x128xf32>
    %cst_23 = arith.constant dense<0.000000e+00> : vector<8x128xf32>
    %34 = tpu.matmul %32, %33, %cst_23 {dimension_numbers = #tpu.dot_dimension_numbers<[1], [0], [0], [1], [0, 0, 1, 1], [], []>} : vector<8x128xf32>, vector<128x128xf32>, vector<8x128xf32> -> vector<8x128xf32>
    %c0_24 = arith.constant 0 : index
    %c0_25 = arith.constant 0 : index
    %35 = vector.load %arg5[%c0_24, %c0_25] : memref<1x128xf32, #tpu.memory_space<vmem>>, vector<1x128xf32>
    %36 = vector.broadcast %35 : vector<1x128xf32> to vector<8x128xf32>
    %37 = arith.addf %34, %36 : vector<8x128xf32>
    %c0_26 = arith.constant 0 : index
    %c0_27 = arith.constant 0 : index
    %38 = vector.load %arg6[%c0_26, %c0_27] : memref<8x128xf32, #tpu.memory_space<vmem>>, vector<8x128xf32>
    tpu.vector_store %arg6[%c0_26, %c0_27], %37 {strides = array<i32>} : memref<8x128xf32, #tpu.memory_space<vmem>>, vector<8x128xf32>,
    return
  }
  func.func @transform_0(%arg0: i32) -> (i32, i32, i32) {
    %c0_i32 = arith.constant 0 : i32
    %c0_i32_0 = arith.constant 0 : i32
    %c0_i32_1 = arith.constant 0 : i32
    return %arg0, %c0_i32, %c0_i32_0 : i32, i32, i32
  }
  func.func @transform_1(%arg0: i32) -> (i32, i32, i32) {
    %c0_i32 = arith.constant 0 : i32
    %c0_i32_0 = arith.constant 0 : i32
    %c0_i32_1 = arith.constant 0 : i32
    %c0_i32_2 = arith.constant 0 : i32
    return %c0_i32, %c0_i32_0, %c0_i32_1 : i32, i32, i32
  }
  func.func @transform_2(%arg0: i32) -> (i32, i32) {
    %c0_i32 = arith.constant 0 : i32
    %c0_i32_0 = arith.constant 0 : i32
    %c0_i32_1 = arith.constant 0 : i32
    return %c0_i32, %c0_i32_0 : i32, i32
  }
  func.func @transform_3(%arg0: i32) -> (i32, i32) {
    %c0_i32 = arith.constant 0 : i32
    %c0_i32_0 = arith.constant 0 : i32
    %c0_i32_1 = arith.constant 0 : i32
    return %c0_i32, %c0_i32_0 : i32, i32
  }
  func.func @transform_4(%arg0: i32) -> (i32, i32) {
    %c0_i32 = arith.constant 0 : i32
    %c0_i32_0 = arith.constant 0 : i32
    %c0_i32_1 = arith.constant 0 : i32
    return %c0_i32, %c0_i32_0 : i32, i32
  }
  func.func @transform_5(%arg0: i32) -> (i32, i32) {
    %c0_i32 = arith.constant 0 : i32
    %c0_i32_0 = arith.constant 0 : i32
    return %arg0, %c0_i32 : i32, i32
  }
}

</mosaic_0001>

<llo_original>
// kernel: tpu_custom_call.1
$region0: #{tpu_custom_call.1}
  #allocation0 [shape = 'u32[]', space=smem, size = 0x4, offset = 0x4, fixed_abs, tag = 'smem constant byte address 0x4 - core index']
  #allocation1 [shape = 'u32[144,128]{1,0:T(1,128)}', space=vmem, size = 0x12000, scoped, tag = 'internal scratch']
  %s0 = inlined_call_operand.hbm [shape: f32[8,16,32], index: 0, kind: input, shape index: {}]
  %s1 = inlined_call_operand.hbm [shape: f32[5,32,128], index: 1, kind: input, shape index: {}]
  %s2 = inlined_call_operand.hbm [shape: f32[16,128], index: 2, kind: input, shape index: {}]
  %s3 = inlined_call_operand.hbm [shape: f32[128,128], index: 3, kind: input, shape index: {}]
  %s4 = inlined_call_operand.vmem [shape: f32[1,128], index: 4, kind: input, shape index: {}]
  %s5 = inlined_call_operand.hbm [shape: f32[8,128], index: 5, kind: output, shape index: {}]
  %s6 = sld [smem:[#allocation0]]
  $region46: #{tpu_custom_call.1} parent=0
    _
  %s8 = ssub.s32 1, %s6
  %s9 = scalar_select 0, %s8, %s6
  $region1: #{tpu_custom_call.1} parent=0
    #allocation2 [shape = 'u8[65536]{0}', space=vmem, size = 0x10000, scoped, tag = 'input window, operand 0, single buffered']
    #allocation3 [shape = 's32[1]{0}', space=sflag, size = 0x4, scoped, tag = 'scoped memory for tpu_custom_call.1']
    #allocation4 [shape = 's32[1]{0}', space=sflag, size = 0x4, scoped, tag = 'scoped memory for tpu_custom_call.1']
    #allocation5 [shape = 'u8[81920]{0}', space=vmem, size = 0x14000, scoped, tag = 'input window, operand 1, single buffered']
    #allocation6 [shape = 's32[1]{0}', space=sflag, size = 0x4, scoped, tag = 'scoped memory for tpu_custom_call.1']
    #allocation7 [shape = 'u8[8192]{0}', space=vmem, size = 0x2000, scoped, tag = 'input window, operand 2, single buffered']
    #allocation8 [shape = 'u8[65536]{0}', space=vmem, size = 0x10000, scoped, tag = 'input window, operand 3, single buffered']
    #allocation9 [shape = 's32[1]{0}', space=sflag, size = 0x4, scoped, tag = 'scoped memory for tpu_custom_call.1']
    #allocation10 [shape = 'u8[4096]{0}', space=vmem, size = 0x1000, scoped, tag = 'output window, operand 0, single buffered']
    %10 = vsyncpa [#allocation3], 0
    %11 = vsyncpa [#allocation6], 0
    %12 = vsyncpa [#allocation9], 0
    %13 = vsyncpa [#allocation4], 0
    // Predicated region
    $region2: #{tpu_custom_call.1} parent=1 // pred_check
      _
    $region3: #{tpu_custom_call.1} parent=1 // pred_check_branch
      %15 = sbr.rel (0) target = $region5
    $region4: #{tpu_custom_call.1} parent=1 // pred_region
      %s17 = ssub.s32 2048, 2048
      %18 = vsyncadd [#allocation3], %s17
      %s19 = sshll.u32 [#allocation2], 4
      %s20 = int_to_ptr.vmem [resolvable:$true] %s19
      %25 = dma.hbm_to_vmem [thread:$0]  %s0, 2048, %s20, [#allocation3], 128, 128, 8
    $region5: #{tpu_custom_call.1} parent=1 // pred_fallthru
      _
    // Predicated region
    $region6: #{tpu_custom_call.1} parent=1 // pred_check
      _
    $region7: #{tpu_custom_call.1} parent=1 // pred_check_branch
      %27 = sbr.rel (0) target = $region9
    $region8: #{tpu_custom_call.1} parent=1 // pred_region
      %s29 = ssub.s32 2560, 2560
      %30 = vsyncadd [#allocation6], %s29
      %s31 = sshll.u32 [#allocation5], 4
      %s32 = int_to_ptr.vmem [resolvable:$true] %s31
      %37 = dma.hbm_to_vmem [thread:$0]  %s1, 2560, %s32, [#allocation6], 128, 128, 8
    $region9: #{tpu_custom_call.1} parent=1 // pred_fallthru
      _
    // Predicated region
    $region10: #{tpu_custom_call.1} parent=1 // pred_check
      _
    $region11: #{tpu_custom_call.1} parent=1 // pred_check_branch
      %39 = sbr.rel (0) target = $region13
    $region12: #{tpu_custom_call.1} parent=1 // pred_region
      %s41 = ssub.s32 256, 256
      %42 = vsyncadd [#allocation6], %s41
      %s43 = sshll.u32 [#allocation7], 4
      %s44 = int_to_ptr.vmem [resolvable:$true] %s43
      %49 = dma.hbm_to_vmem [thread:$0]  %s2, 256, %s44, [#allocation6], 128, 128, 8
    $region13: #{tpu_custom_call.1} parent=1 // pred_fallthru
      _
    // Predicated region
    $region14: #{tpu_custom_call.1} parent=1 // pred_check
      _
    $region15: #{tpu_custom_call.1} parent=1 // pred_check_branch
      %51 = sbr.rel (0) target = $region17
    $region16: #{tpu_custom_call.1} parent=1 // pred_region
      %s53 = ssub.s32 2048, 2048
      %54 = vsyncadd [#allocation9], %s53
      %s55 = sshll.u32 [#allocation8], 4
      %s56 = int_to_ptr.vmem [resolvable:$true] %s55
      %61 = dma.hbm_to_vmem [thread:$0]  %s3, 2048, %s56, [#allocation9], 128, 128, 8
    $region17: #{tpu_custom_call.1} parent=1 // pred_fallthru
      _
    // Predicated region
    $region18: #{tpu_custom_call.1} parent=1 // pred_check
      _
    $region19: #{tpu_custom_call.1} parent=1 // pred_check_branch
      %63 = sbr.rel (0) target = $region21
    $region20: #{tpu_custom_call.1} parent=1 // pred_region
      _
    $region21: #{tpu_custom_call.1} parent=1 // pred_fallthru
      _
    // Predicated region
    $region22: #{tpu_custom_call.1} parent=1 // pred_check
      _
    $region23: #{tpu_custom_call.1} parent=1 // pred_check_branch
      %65 = sbr.rel (0) target = $region25
    $region24: #{tpu_custom_call.1} parent=1 // pred_region
      %66 = dma.done [#allocation3], 2048
    $region25: #{tpu_custom_call.1} parent=1 // pred_fallthru
      _
    // Predicated region
    $region26: #{tpu_custom_call.1} parent=1 // pred_check
      _
    $region27: #{tpu_custom_call.1} parent=1 // pred_check_branch
      %68 = sbr.rel (0) target = $region29
    $region28: #{tpu_custom_call.1} parent=1 // pred_region
      %69 = dma.done [#allocation6], 2560
    $region29: #{tpu_custom_call.1} parent=1 // pred_fallthru
      _
    // Predicated region
    $region30: #{tpu_custom_call.1} parent=1 // pred_check
      _
    $region31: #{tpu_custom_call.1} parent=1 // pred_check_branch
      %71 = sbr.rel (0) target = $region33
    $region32: #{tpu_custom_call.1} parent=1 // pred_region
      %72 = dma.done [#allocation6], 256
    $region33: #{tpu_custom_call.1} parent=1 // pred_fallthru
      _
    // Predicated region
    $region34: #{tpu_custom_call.1} parent=1 // pred_check
      _
    $region35: #{tpu_custom_call.1} parent=1 // pred_check_branch
      %74 = sbr.rel (0) target = $region37
    $region36: #{tpu_custom_call.1} parent=1 // pred_region
      %75 = dma.done [#allocation9], 2048
    $region37: #{tpu_custom_call.1} parent=1 // pred_fallthru
      _
    %v76 = vld [vmem:[#allocation2] sm:$0xff]
    %v77 = vld [vmem:[#allocation2 + $0x8] sm:$0xff]
    %v78 = vld [vmem:[#allocation2 + $0x10] sm:$0xff]
    %v79 = vld [vmem:[#allocation2 + $0x18] sm:$0xff]
    %v80 = vld [vmem:[#allocation2 + $0x20] sm:$0xff]
    %v81 = vld [vmem:[#allocation2 + $0x28] sm:$0xff]
    %v82 = vld [vmem:[#allocation2 + $0x30] sm:$0xff]
    %v83 = vld [vmem:[#allocation2 + $0x38] sm:$0xff]
    %v84 = vld [vmem:[#allocation2 + $0x40] sm:$0xff]
    %v85 = vld [vmem:[#allocation2 + $0x48] sm:$0xff]
    %v86 = vld [vmem:[#allocation2 + $0x50] sm:$0xff]
    %v87 = vld [vmem:[#allocation2 + $0x58] sm:$0xff]
    %v88 = vld [vmem:[#allocation2 + $0x60] sm:$0xff]
    %v89 = vld [vmem:[#allocation2 + $0x68] sm:$0xff]
    %v90 = vld [vmem:[#allocation2 + $0x70] sm:$0xff]
    %v91 = vld [vmem:[#allocation2 + $0x78] sm:$0xff]
    %v92 = vld [vmem:[#allocation5] sm:$0xff]
    %v93 = vld [vmem:[#allocation5 + $0x8] sm:$0xff]
    %v94 = vld [vmem:[#allocation5 + $0x10] sm:$0xff]
    %v95 = vld [vmem:[#allocation5 + $0x18] sm:$0xff]
    %v96 = vrot.slane %v76, 1
    %v97 = vrot.slane %v77, 1
    %v98 = vrot.slane %v78, 1
    %v99 = vrot.slane %v79, 1
    %v100 = vrot.slane %v80, 1
    %v101 = vrot.slane %v81, 1
    %v102 = vrot.slane %v82, 1
    %v103 = vrot.slane %v83, 1
    %v104 = vrot.slane %v84, 1
    %v105 = vrot.slane %v85, 1
    %v106 = vrot.slane %v86, 1
    %v107 = vrot.slane %v87, 1
    %v108 = vrot.slane %v88, 1
    %v109 = vrot.slane %v89, 1
    %v110 = vrot.slane %v90, 1
    %v111 = vrot.slane %v91, 1
    %v112 = vlaneseq
    %v113 = vshrl.u32 %v112, 7
    %vm114 = vcmp.lt.s32.totalorder %v113, 7
    %v115 = vsel %vm114, %v110, %v111
    %v116 = vsel %vm114, %v109, %v110
    %v117 = vsel %vm114, %v108, %v109
    %v118 = vsel %vm114, %v107, %v108
    %v119 = vsel %vm114, %v106, %v107
    %v120 = vsel %vm114, %v105, %v106
    %v121 = vsel %vm114, %v104, %v105
    %v122 = vsel %vm114, %v103, %v104
    %v123 = vsel %vm114, %v102, %v103
    %v124 = vsel %vm114, %v101, %v102
    %v125 = vsel %vm114, %v100, %v101
    %v126 = vsel %vm114, %v99, %v100
    %v127 = vsel %vm114, %v98, %v99
    %v128 = vsel %vm114, %v97, %v98
    %v129 = vsel %vm114, %v96, %v97
    %v130 = vsel %vm114, %v111, %v96
    %s131 = scalar_lea.vmem [#allocation5], 32
    %v132 = vld [vmem:[%s131] sm:$0xff]
    %v133 = vld [vmem:[%s131 + $0x8] sm:$0xff]
    %v134 = vld [vmem:[%s131 + $0x10] sm:$0xff]
    %v135 = vld [vmem:[%s131 + $0x18] sm:$0xff]
    %vm136 = vcmask 261120
    %v138 = vsel %vm136, %v129, 0
    %v141 = vsel %vm136, %v128, 0
    %v144 = vsel %vm136, %v127, 0
    %v147 = vsel %vm136, %v126, 0
    %v150 = vsel %vm136, %v125, 0
    %v153 = vsel %vm136, %v124, 0
    %v156 = vsel %vm136, %v123, 0
    %v159 = vsel %vm136, %v122, 0
    %v162 = vsel %vm136, %v121, 0
    %v165 = vsel %vm136, %v120, 0
    %v168 = vsel %vm136, %v119, 0
    %v171 = vsel %vm136, %v118, 0
    %v174 = vsel %vm136, %v117, 0
    %v177 = vsel %vm136, %v116, 0
    %v180 = vsel %vm136, %v115, 0
    %v183 = vsel %vm136, %v130, 0
    %185 = vmatprep.subr.mxu0 0.0
    %186 = vmatpush1.msra.mxu0 %v132
    %187 = vmatprep.subr.mxu0 0.0
    %188 = vmatpush1.msra.mxu0 %v133
    %189 = vmatprep.subr.mxu0 0.0
    %190 = vmatpush1.msra.mxu0 %v134
    %191 = vmatprep.subr.mxu0 0.0
    %192 = vmatpush1.msra.mxu0 %v135
    %193 = vmatprep.subr.mxu0 0.0
    %194 = vmatpush1.msra.mxu0 0.0
    %195 = vmatprep.subr.mxu0 0.0
    %196 = vmatpush1.msra.mxu0 0.0
    %197 = vmatprep.subr.mxu0 0.0
    %198 = vmatpush1.msra.mxu0 0.0
    %199 = vmatprep.subr.mxu0 0.0
    %200 = vmatpush1.msra.mxu0 0.0
    %201 = vmatprep.subr.mxu0 0.0
    %202 = vmatpush1.msra.mxu0 0.0
    %203 = vmatprep.subr.mxu0 0.0
    %204 = vmatpush1.msra.mxu0 0.0
    %205 = vmatprep.subr.mxu0 0.0
    %206 = vmatpush1.msra.mxu0 0.0
    %207 = vmatprep.subr.mxu0 0.0
    %208 = vmatpush1.msra.mxu0 0.0
    %209 = vmatprep.subr.mxu0 0.0
    %210 = vmatpush1.msra.mxu0 0.0
    %211 = vmatprep.subr.mxu0 0.0
    %212 = vmatpush1.msra.mxu0 0.0
    %213 = vmatprep.subr.mxu0 0.0
    %214 = vmatpush1.msra.mxu0 0.0
    %215 = vmatprep.subr.mxu0 0.0
    %216 = vmatpush1.msra.mxu0 0.0
    %217 = vmatprep.subr.mxu0 0.0
    %218 = vmatpush1.msra.mxu0 0.0
    %219 = vmatprep.subr.mxu0 0.0
    %220 = vmatpush1.msra.mxu0 0.0
    %221 = vmatprep.subr.mxu0 0.0
    %222 = vmatpush1.msra.mxu0 0.0
    %223 = vmatprep.subr.mxu0 0.0
    %224 = vmatpush1.msra.mxu0 0.0
    %225 = vmatprep.subr.mxu0 0.0
    %226 = vmatpush1.msra.mxu0 0.0
    %227 = vmatprep.subr.mxu0 0.0
    %228 = vmatpush1.msra.mxu0 0.0
    %229 = vmatprep.subr.mxu0 0.0
    %230 = vmatpush1.msra.mxu0 0.0
    %231 = vmatprep.subr.mxu0 0.0
    %232 = vmatpush1.msra.mxu0 0.0
    %233 = vmatprep.subr.mxu0 0.0
    %234 = vmatpush1.msra.mxu0 0.0
    %235 = vmatprep.subr.mxu0 0.0
    %236 = vmatpush1.msra.mxu0 0.0
    %237 = vmatprep.subr.mxu0 0.0
    %238 = vmatpush1.msra.mxu0 0.0
    %239 = vmatprep.subr.mxu0 0.0
    %240 = vmatpush1.msra.mxu0 0.0
    %241 = vmatprep.subr.mxu0 0.0
    %242 = vmatpush1.msra.mxu0 0.0
    %243 = vmatprep.subr.mxu0 0.0
    %244 = vmatpush1.msra.mxu0 0.0
    %245 = vmatprep.subr.mxu0 0.0
    %246 = vmatpush1.msra.mxu0 0.0
    %247 = vmatprep.subr.mxu0 0.0
    %248 = vmatpush1.msra.mxu0 0.0
    %249 = vmatprep.mubr.f32.mxu0 0.0
    %250 = vmatmul.mubr.f32.gmra.mrb[0].mxu0 %v138
    %v251 = vpop.f32.mrb[0].mxu0
    %v252 = vadd.f32 0.0, %v251
    %v253 = vpop.f32.mrb[0].mxu0
    %254 = vmatprep.mubr.f32.mxu0 0.0
    %255 = vmatmul.mubr.f32.gmra.mrb[0].mxu0 %v141
    %v256 = vpop.f32.mrb[0].mxu0
    %v257 = vadd.f32 0.0, %v256
    %v258 = vpop.f32.mrb[0].mxu0
    %259 = vmatprep.mubr.f32.mxu0 0.0
    %260 = vmatmul.mubr.f32.gmra.mrb[0].mxu0 %v144
    %v261 = vpop.f32.mrb[0].mxu0
    %v262 = vadd.f32 0.0, %v261
    %v263 = vpop.f32.mrb[0].mxu0
    %264 = vmatprep.mubr.f32.mxu0 0.0
    %265 = vmatmul.mubr.f32.gmra.mrb[0].mxu0 %v147
    %v266 = vpop.f32.mrb[0].mxu0
    %v267 = vadd.f32 0.0, %v266
    %v268 = vpop.f32.mrb[0].mxu0
    %269 = vmatprep.mubr.f32.mxu0 0.0
    %270 = vmatmul.mubr.f32.gmra.mrb[0].mxu0 %v150
    %v271 = vpop.f32.mrb[0].mxu0
    %v272 = vadd.f32 0.0, %v271
    %v273 = vpop.f32.mrb[0].mxu0
    %274 = vmatprep.mubr.f32.mxu0 0.0
    %275 = vmatmul.mubr.f32.gmra.mrb[0].mxu0 %v153
    %v276 = vpop.f32.mrb[0].mxu0
    %v277 = vadd.f32 0.0, %v276
    %v278 = vpop.f32.mrb[0].mxu0
    %279 = vmatprep.mubr.f32.mxu0 0.0
    %280 = vmatmul.mubr.f32.gmra.mrb[0].mxu0 %v156
    %v281 = vpop.f32.mrb[0].mxu0
    %v282 = vadd.f32 0.0, %v281
    %v283 = vpop.f32.mrb[0].mxu0
    %284 = vmatprep.mubr.f32.mxu0 0.0
    %285 = vmatmul.mubr.f32.gmra.mrb[0].mxu0 %v159
    %v286 = vpop.f32.mrb[0].mxu0
    %v287 = vadd.f32 0.0, %v286
    %v288 = vpop.f32.mrb[0].mxu0
    %289 = vmatprep.mubr.f32.mxu0 0.0
    %290 = vmatmul.mubr.f32.gmra.mrb[0].mxu0 %v162
    %v291 = vpop.f32.mrb[0].mxu0
    %v292 = vadd.f32 0.0, %v291
    %v293 = vpop.f32.mrb[0].mxu0
    %294 = vmatprep.mubr.f32.mxu0 0.0
    %295 = vmatmul.mubr.f32.gmra.mrb[0].mxu0 %v165
    %v296 = vpop.f32.mrb[0].mxu0
    %v297 = vadd.f32 0.0, %v296
    %v298 = vpop.f32.mrb[0].mxu0
    %299 = vmatprep.mubr.f32.mxu0 0.0
    %300 = vmatmul.mubr.f32.gmra.mrb[0].mxu0 %v168
    %v301 = vpop.f32.mrb[0].mxu0
    %v302 = vadd.f32 0.0, %v301
    %v303 = vpop.f32.mrb[0].mxu0
    %304 = vmatprep.mubr.f32.mxu0 0.0
    %305 = vmatmul.mubr.f32.gmra.mrb[0].mxu0 %v171
    %v306 = vpop.f32.mrb[0].mxu0
    %v307 = vadd.f32 0.0, %v306
    %v308 = vpop.f32.mrb[0].mxu0
    %309 = vmatprep.mubr.f32.mxu0 0.0
    %310 = vmatmul.mubr.f32.gmra.mrb[0].mxu0 %v174
    %v311 = vpop.f32.mrb[0].mxu0
    %v312 = vadd.f32 0.0, %v311
    %v313 = vpop.f32.mrb[0].mxu0
    %314 = vmatprep.mubr.f32.mxu0 0.0
    %315 = vmatmul.mubr.f32.gmra.mrb[0].mxu0 %v177
    %v316 = vpop.f32.mrb[0].mxu0
    %v317 = vadd.f32 0.0, %v316
    %v318 = vpop.f32.mrb[0].mxu0
    %319 = vmatprep.mubr.f32.mxu0 0.0
    %320 = vmatmul.mubr.f32.gmra.mrb[0].mxu0 %v180
    %v321 = vpop.f32.mrb[0].mxu0
    %v322 = vadd.f32 0.0, %v321
    %v323 = vpop.f32.mrb[0].mxu0
    %324 = vmatprep.mubr.f32.mxu0 0.0
    %325 = vmatmul.mubr.f32.gmra.mrb[0].mxu0 %v183
    %v326 = vpop.f32.mrb[0].mxu0
    %v327 = vadd.f32 0.0, %v326
    %v328 = vpop.f32.mrb[0].mxu0
    %329 = vdwg.mxu0
    %v331 = vsel %vm136, %v76, 0
    %v334 = vsel %vm136, %v77, 0
    %v337 = vsel %vm136, %v78, 0
    %v340 = vsel %vm136, %v79, 0
    %v343 = vsel %vm136, %v80, 0
    %v346 = vsel %vm136, %v81, 0
    %v349 = vsel %vm136, %v82, 0
    %v352 = vsel %vm136, %v83, 0
    %v355 = vsel %vm136, %v84, 0
    %v358 = vsel %vm136, %v85, 0
    %v361 = vsel %vm136, %v86, 0
    %v364 = vsel %vm136, %v87, 0
    %v367 = vsel %vm136, %v88, 0
    %v370 = vsel %vm136, %v89, 0
    %v373 = vsel %vm136, %v90, 0
    %v376 = vsel %vm136, %v91, 0
    %378 = vmatprep.subr.mxu0 0.0
    %379 = vmatpush1.msra.mxu0 %v92
    %380 = vmatprep.subr.mxu0 0.0
    %381 = vmatpush1.msra.mxu0 %v93
    %382 = vmatprep.subr.mxu0 0.0
    %383 = vmatpush1.msra.mxu0 %v94
    %384 = vmatprep.subr.mxu0 0.0
    %385 = vmatpush1.msra.mxu0 %v95
    %386 = vmatprep.subr.mxu0 0.0
    %387 = vmatpush1.msra.mxu0 0.0
    %388 = vmatprep.subr.mxu0 0.0
    %389 = vmatpush1.msra.mxu0 0.0
    %390 = vmatprep.subr.mxu0 0.0
    %391 = vmatpush1.msra.mxu0 0.0
    %392 = vmatprep.subr.mxu0 0.0
    %393 = vmatpush1.msra.mxu0 0.0
    %394 = vmatprep.subr.mxu0 0.0
    %395 = vmatpush1.msra.mxu0 0.0
    %396 = vmatprep.subr.mxu0 0.0
    %397 = vmatpush1.msra.mxu0 0.0
    %398 = vmatprep.subr.mxu0 0.0
    %399 = vmatpush1.msra.mxu0 0.0
    %400 = vmatprep.subr.mxu0 0.0
    %401 = vmatpush1.msra.mxu0 0.0
    %402 = vmatprep.subr.mxu0 0.0
    %403 = vmatpush1.msra.mxu0 0.0
    %404 = vmatprep.subr.mxu0 0.0
    %405 = vmatpush1.msra.mxu0 0.0
    %406 = vmatprep.subr.mxu0 0.0
    %407 = vmatpush1.msra.mxu0 0.0
    %408 = vmatprep.subr.mxu0 0.0
    %409 = vmatpush1.msra.mxu0 0.0
    %410 = vmatprep.subr.mxu0 0.0
    %411 = vmatpush1.msra.mxu0 0.0
    %412 = vmatprep.subr.mxu0 0.0
    %413 = vmatpush1.msra.mxu0 0.0
    %414 = vmatprep.subr.mxu0 0.0
    %415 = vmatpush1.msra.mxu0 0.0
    %416 = vmatprep.subr.mxu0 0.0
    %417 = vmatpush1.msra.mxu0 0.0
    %418 = vmatprep.subr.mxu0 0.0
    %419 = vmatpush1.msra.mxu0 0.0
    %420 = vmatprep.subr.mxu0 0.0
    %421 = vmatpush1.msra.mxu0 0.0
    %422 = vmatprep.subr.mxu0 0.0
    %423 = vmatpush1.msra.mxu0 0.0
    %424 = vmatprep.subr.mxu0 0.0
    %425 = vmatpush1.msra.mxu0 0.0
    %426 = vmatprep.subr.mxu0 0.0
    %427 = vmatpush1.msra.mxu0 0.0
    %428 = vmatprep.subr.mxu0 0.0
    %429 = vmatpush1.msra.mxu0 0.0
    %430 = vmatprep.subr.mxu0 0.0
    %431 = vmatpush1.msra.mxu0 0.0
    %432 = vmatprep.subr.mxu0 0.0
    %433 = vmatpush1.msra.mxu0 0.0
    %434 = vmatprep.subr.mxu0 0.0
    %435 = vmatpush1.msra.mxu0 0.0
    %436 = vmatprep.subr.mxu0 0.0
    %437 = vmatpush1.msra.mxu0 0.0
    %438 = vmatprep.subr.mxu0 0.0
    %439 = vmatpush1.msra.mxu0 0.0
    %440 = vmatprep.subr.mxu0 0.0
    %441 = vmatpush1.msra.mxu0 0.0
    %442 = vmatprep.mubr.f32.mxu0 0.0
    %443 = vmatmul.mubr.f32.gmra.mrb[0].mxu0 %v331
    %v444 = vpop.f32.mrb[0].mxu0
    %v445 = vadd.f32 %v252, %v444
    %v446 = vpop.f32.mrb[0].mxu0
    %447 = vmatprep.mubr.f32.mxu0 0.0
    %448 = vmatmul.mubr.f32.gmra.mrb[0].mxu0 %v334
    %v449 = vpop.f32.mrb[0].mxu0
    %v450 = vadd.f32 %v257, %v449
    %v451 = vpop.f32.mrb[0].mxu0
    %452 = vmatprep.mubr.f32.mxu0 0.0
    %453 = vmatmul.mubr.f32.gmra.mrb[0].mxu0 %v337
    %v454 = vpop.f32.mrb[0].mxu0
    %v455 = vadd.f32 %v262, %v454
    %v456 = vpop.f32.mrb[0].mxu0
    %457 = vmatprep.mubr.f32.mxu0 0.0
    %458 = vmatmul.mubr.f32.gmra.mrb[0].mxu0 %v340
    %v459 = vpop.f32.mrb[0].mxu0
    %v460 = vadd.f32 %v267, %v459
    %v461 = vpop.f32.mrb[0].mxu0
    %462 = vmatprep.mubr.f32.mxu0 0.0
    %463 = vmatmul.mubr.f32.gmra.mrb[0].mxu0 %v343
    %v464 = vpop.f32.mrb[0].mxu0
    %v465 = vadd.f32 %v272, %v464
    %v466 = vpop.f32.mrb[0].mxu0
    %467 = vmatprep.mubr.f32.mxu0 0.0
    %468 = vmatmul.mubr.f32.gmra.mrb[0].mxu0 %v346
    %v469 = vpop.f32.mrb[0].mxu0
    %v470 = vadd.f32 %v277, %v469
    %v471 = vpop.f32.mrb[0].mxu0
    %472 = vmatprep.mubr.f32.mxu0 0.0
    %473 = vmatmul.mubr.f32.gmra.mrb[0].mxu0 %v349
    %v474 = vpop.f32.mrb[0].mxu0
    %v475 = vadd.f32 %v282, %v474
    %v476 = vpop.f32.mrb[0].mxu0
    %477 = vmatprep.mubr.f32.mxu0 0.0
    %478 = vmatmul.mubr.f32.gmra.mrb[0].mxu0 %v352
    %v479 = vpop.f32.mrb[0].mxu0
    %v480 = vadd.f32 %v287, %v479
    %v481 = vpop.f32.mrb[0].mxu0
    %482 = vmatprep.mubr.f32.mxu0 0.0
    %483 = vmatmul.mubr.f32.gmra.mrb[0].mxu0 %v355
    %v484 = vpop.f32.mrb[0].mxu0
    %v485 = vadd.f32 %v292, %v484
    %v486 = vpop.f32.mrb[0].mxu0
    %487 = vmatprep.mubr.f32.mxu0 0.0
    %488 = vmatmul.mubr.f32.gmra.mrb[0].mxu0 %v358
    %v489 = vpop.f32.mrb[0].mxu0
    %v490 = vadd.f32 %v297, %v489
    %v491 = vpop.f32.mrb[0].mxu0
    %492 = vmatprep.mubr.f32.mxu0 0.0
    %493 = vmatmul.mubr.f32.gmra.mrb[0].mxu0 %v361
    %v494 = vpop.f32.mrb[0].mxu0
    %v495 = vadd.f32 %v302, %v494
    %v496 = vpop.f32.mrb[0].mxu0
    %497 = vmatprep.mubr.f32.mxu0 0.0
    %498 = vmatmul.mubr.f32.gmra.mrb[0].mxu0 %v364
    %v499 = vpop.f32.mrb[0].mxu0
    %v500 = vadd.f32 %v307, %v499
    %v501 = vpop.f32.mrb[0].mxu0
    %502 = vmatprep.mubr.f32.mxu0 0.0
    %503 = vmatmul.mubr.f32.gmra.mrb[0].mxu0 %v367
    %v504 = vpop.f32.mrb[0].mxu0
    %v505 = vadd.f32 %v312, %v504
    %v506 = vpop.f32.mrb[0].mxu0
    %507 = vmatprep.mubr.f32.mxu0 0.0
    %508 = vmatmul.mubr.f32.gmra.mrb[0].mxu0 %v370
    %v509 = vpop.f32.mrb[0].mxu0
    %v510 = vadd.f32 %v317, %v509
    %v511 = vpop.f32.mrb[0].mxu0
    %512 = vmatprep.mubr.f32.mxu0 0.0
    %513 = vmatmul.mubr.f32.gmra.mrb[0].mxu0 %v373
    %v514 = vpop.f32.mrb[0].mxu0
    %v515 = vadd.f32 %v322, %v514
    %v516 = vpop.f32.mrb[0].mxu0
    %517 = vmatprep.mubr.f32.mxu0 0.0
    %518 = vmatmul.mubr.f32.gmra.mrb[0].mxu0 %v376
    %v519 = vpop.f32.mrb[0].mxu0
    %v520 = vadd.f32 %v327, %v519
    %v521 = vpop.f32.mrb[0].mxu0
    %522 = vdwg.mxu0
    %v523 = vrot.slane %v76, 2
    %v524 = vrot.slane %v77, 2
    %v525 = vrot.slane %v78, 2
    %v526 = vrot.slane %v79, 2
    %v527 = vrot.slane %v80, 2
    %v528 = vrot.slane %v81, 2
    %v529 = vrot.slane %v82, 2
    %v530 = vrot.slane %v83, 2
    %v531 = vrot.slane %v84, 2
    %v532 = vrot.slane %v85, 2
    %v533 = vrot.slane %v86, 2
    %v534 = vrot.slane %v87, 2
    %v535 = vrot.slane %v88, 2
    %v536 = vrot.slane %v89, 2
    %v537 = vrot.slane %v90, 2
    %v538 = vrot.slane %v91, 2
    %vm539 = vcmp.lt.s32.totalorder %v113, 6
    %v540 = vsel %vm539, %v537, %v538
    %v541 = vsel %vm539, %v536, %v537
    %v542 = vsel %vm539, %v535, %v536
    %v543 = vsel %vm539, %v534, %v535
    %v544 = vsel %vm539, %v533, %v534
    %v545 = vsel %vm539, %v532, %v533
    %v546 = vsel %vm539, %v531, %v532
    %v547 = vsel %vm539, %v530, %v531
    %v548 = vsel %vm539, %v529, %v530
    %v549 = vsel %vm539, %v528, %v529
    %v550 = vsel %vm539, %v527, %v528
    %v551 = vsel %vm539, %v526, %v527
    %v552 = vsel %vm539, %v525, %v526
    %v553 = vsel %vm539, %v524, %v525
    %v554 = vsel %vm539, %v523, %v524
    %v555 = vsel %vm539, %v538, %v523
    %s556 = scalar_lea.vmem [#allocation5], 64
    %v557 = vld [vmem:[%s556] sm:$0xff]
    %v558 = vld [vmem:[%s556 + $0x8] sm:$0xff]
    %v559 = vld [vmem:[%s556 + $0x10] sm:$0xff]
    %v560 = vld [vmem:[%s556 + $0x18] sm:$0xff]
    %v562 = vsel %vm136, %v554, 0
    %v565 = vsel %vm136, %v553, 0
    %v568 = vsel %vm136, %v552, 0
    %v571 = vsel %vm136, %v551, 0
    %v574 = vsel %vm136, %v550, 0
    %v577 = vsel %vm136, %v549, 0
    %v580 = vsel %vm136, %v548, 0
    %v583 = vsel %vm136, %v547, 0
    %v586 = vsel %vm136, %v546, 0
    %v589 = vsel %vm136, %v545, 0
    %v592 = vsel %vm136, %v544, 0
    %v595 = vsel %vm136, %v543, 0
    %v598 = vsel %vm136, %v542, 0
    %v601 = vsel %vm136, %v541, 0
    %v604 = vsel %vm136, %v540, 0
    %v607 = vsel %vm136, %v555, 0
    %609 = vmatprep.subr.mxu0 0.0
    %610 = vmatpush1.msra.mxu0 %v557
    %611 = vmatprep.subr.mxu0 0.0
    %612 = vmatpush1.msra.mxu0 %v558
    %613 = vmatprep.subr.mxu0 0.0
    %614 = vmatpush1.msra.mxu0 %v559
    %615 = vmatprep.subr.mxu0 0.0
    %616 = vmatpush1.msra.mxu0 %v560
    %617 = vmatprep.subr.mxu0 0.0
    %618 = vmatpush1.msra.mxu0 0.0
    %619 = vmatprep.subr.mxu0 0.0
    %620 = vmatpush1.msra.mxu0 0.0
    %621 = vmatprep.subr.mxu0 0.0
    %622 = vmatpush1.msra.mxu0 0.0
    %623 = vmatprep.subr.mxu0 0.0
    %624 = vmatpush1.msra.mxu0 0.0
    %625 = vmatprep.subr.mxu0 0.0
    %626 = vmatpush1.msra.mxu0 0.0
    %627 = vmatprep.subr.mxu0 0.0
    %628 = vmatpush1.msra.mxu0 0.0
    %629 = vmatprep.subr.mxu0 0.0
    %630 = vmatpush1.msra.mxu0 0.0
    %631 = vmatprep.subr.mxu0 0.0
    %632 = vmatpush1.msra.mxu0 0.0
    %633 = vmatprep.subr.mxu0 0.0
    %634 = vmatpush1.msra.mxu0 0.0
    %635 = vmatprep.subr.mxu0 0.0
    %636 = vmatpush1.msra.mxu0 0.0
    %637 = vmatprep.subr.mxu0 0.0
    %638 = vmatpush1.msra.mxu0 0.0
    %639 = vmatprep.subr.mxu0 0.0
    %640 = vmatpush1.msra.mxu0 0.0
    %641 = vmatprep.subr.mxu0 0.0
    %642 = vmatpush1.msra.mxu0 0.0
    %643 = vmatprep.subr.mxu0 0.0
    %644 = vmatpush1.msra.mxu0 0.0
    %645 = vmatprep.subr.mxu0 0.0
    %646 = vmatpush1.msra.mxu0 0.0
    %647 = vmatprep.subr.mxu0 0.0
    %648 = vmatpush1.msra.mxu0 0.0
    %649 = vmatprep.subr.mxu0 0.0
    %650 = vmatpush1.msra.mxu0 0.0
    %651 = vmatprep.subr.mxu0 0.0
    %652 = vmatpush1.msra.mxu0 0.0
    %653 = vmatprep.subr.mxu0 0.0
    %654 = vmatpush1.msra.mxu0 0.0
    %655 = vmatprep.subr.mxu0 0.0
    %656 = vmatpush1.msra.mxu0 0.0
    %657 = vmatprep.subr.mxu0 0.0
    %658 = vmatpush1.msra.mxu0 0.0
    %659 = vmatprep.subr.mxu0 0.0
    %660 = vmatpush1.msra.mxu0 0.0
    %661 = vmatprep.subr.mxu0 0.0
    %662 = vmatpush1.msra.mxu0 0.0
    %663 = vmatprep.subr.mxu0 0.0
    %664 = vmatpush1.msra.mxu0 0.0
    %665 = vmatprep.subr.mxu0 0.0
    %666 = vmatpush1.msra.mxu0 0.0
    %667 = vmatprep.subr.mxu0 0.0
    %668 = vmatpush1.msra.mxu0 0.0
    %669 = vmatprep.subr.mxu0 0.0
    %670 = vmatpush1.msra.mxu0 0.0
    %671 = vmatprep.subr.mxu0 0.0
    %672 = vmatpush1.msra.mxu0 0.0
    %673 = vmatprep.mubr.f32.mxu0 0.0
    %674 = vmatmul.mubr.f32.gmra.mrb[0].mxu0 %v562
    %v675 = vpop.f32.mrb[0].mxu0
    %v676 = vadd.f32 0.0, %v675
    %v677 = vpop.f32.mrb[0].mxu0
    %678 = vmatprep.mubr.f32.mxu0 0.0
    %679 = vmatmul.mubr.f32.gmra.mrb[0].mxu0 %v565
    %v680 = vpop.f32.mrb[0].mxu0
    %v681 = vadd.f32 0.0, %v680
    %v682 = vpop.f32.mrb[0].mxu0
    %683 = vmatprep.mubr.f32.mxu0 0.0
    %684 = vmatmul.mubr.f32.gmra.mrb[0].mxu0 %v568
    %v685 = vpop.f32.mrb[0].mxu0
    %v686 = vadd.f32 0.0, %v685
    %v687 = vpop.f32.mrb[0].mxu0
    %688 = vmatprep.mubr.f32.mxu0 0.0
    %689 = vmatmul.mubr.f32.gmra.mrb[0].mxu0 %v571
    %v690 = vpop.f32.mrb[0].mxu0
    %v691 = vadd.f32 0.0, %v690
    %v692 = vpop.f32.mrb[0].mxu0
    %693 = vmatprep.mubr.f32.mxu0 0.0
    %694 = vmatmul.mubr.f32.gmra.mrb[0].mxu0 %v574
    %v695 = vpop.f32.mrb[0].mxu0
    %v696 = vadd.f32 0.0, %v695
    %v697 = vpop.f32.mrb[0].mxu0
    %698 = vmatprep.mubr.f32.mxu0 0.0
    %699 = vmatmul.mubr.f32.gmra.mrb[0].mxu0 %v577
    %v700 = vpop.f32.mrb[0].mxu0
    %v701 = vadd.f32 0.0, %v700
    %v702 = vpop.f32.mrb[0].mxu0
    %703 = vmatprep.mubr.f32.mxu0 0.0
    %704 = vmatmul.mubr.f32.gmra.mrb[0].mxu0 %v580
    %v705 = vpop.f32.mrb[0].mxu0
    %v706 = vadd.f32 0.0, %v705
    %v707 = vpop.f32.mrb[0].mxu0
    %708 = vmatprep.mubr.f32.mxu0 0.0
    %709 = vmatmul.mubr.f32.gmra.mrb[0].mxu0 %v583
    %v710 = vpop.f32.mrb[0].mxu0
    %v711 = vadd.f32 0.0, %v710
    %v712 = vpop.f32.mrb[0].mxu0
    %713 = vmatprep.mubr.f32.mxu0 0.0
    %714 = vmatmul.mubr.f32.gmra.mrb[0].mxu0 %v586
    %v715 = vpop.f32.mrb[0].mxu0
    %v716 = vadd.f32 0.0, %v715
    %v717 = vpop.f32.mrb[0].mxu0
    %718 = vmatprep.mubr.f32.mxu0 0.0
    %719 = vmatmul.mubr.f32.gmra.mrb[0].mxu0 %v589
    %v720 = vpop.f32.mrb[0].mxu0
    %v721 = vadd.f32 0.0, %v720
    %v722 = vpop.f32.mrb[0].mxu0
    %723 = vmatprep.mubr.f32.mxu0 0.0
    %724 = vmatmul.mubr.f32.gmra.mrb[0].mxu0 %v592
    %v725 = vpop.f32.mrb[0].mxu0
    %v726 = vadd.f32 0.0, %v725
    %v727 = vpop.f32.mrb[0].mxu0
    %728 = vmatprep.mubr.f32.mxu0 0.0
    %729 = vmatmul.mubr.f32.gmra.mrb[0].mxu0 %v595
    %v730 = vpop.f32.mrb[0].mxu0
    %v731 = vadd.f32 0.0, %v730
    %v732 = vpop.f32.mrb[0].mxu0
    %733 = vmatprep.mubr.f32.mxu0 0.0
    %734 = vmatmul.mubr.f32.gmra.mrb[0].mxu0 %v598
    %v735 = vpop.f32.mrb[0].mxu0
    %v736 = vadd.f32 0.0, %v735
    %v737 = vpop.f32.mrb[0].mxu0
    %738 = vmatprep.mubr.f32.mxu0 0.0
    %739 = vmatmul.mubr.f32.gmra.mrb[0].mxu0 %v601
    %v740 = vpop.f32.mrb[0].mxu0
    %v741 = vadd.f32 0.0, %v740
    %v742 = vpop.f32.mrb[0].mxu0
    %743 = vmatprep.mubr.f32.mxu0 0.0
    %744 = vmatmul.mubr.f32.gmra.mrb[0].mxu0 %v604
    %v745 = vpop.f32.mrb[0].mxu0
    %v746 = vadd.f32 0.0, %v745
    %v747 = vpop.f32.mrb[0].mxu0
    %748 = vmatprep.mubr.f32.mxu0 0.0
    %749 = vmatmul.mubr.f32.gmra.mrb[0].mxu0 %v607
    %v750 = vpop.f32.mrb[0].mxu0
    %v751 = vadd.f32 0.0, %v750
    %v752 = vpop.f32.mrb[0].mxu0
    %753 = vdwg.mxu0
    %v754 = vadd.f32 %v445, %v676
    %v755 = vadd.f32 %v450, %v681
    %v756 = vadd.f32 %v455, %v686
    %v757 = vadd.f32 %v460, %v691
    %v758 = vadd.f32 %v465, %v696
    %v759 = vadd.f32 %v470, %v701
    %v760 = vadd.f32 %v475, %v706
    %v761 = vadd.f32 %v480, %v711
    %v762 = vadd.f32 %v485, %v716
    %v763 = vadd.f32 %v490, %v721
    %v764 = vadd.f32 %v495, %v726
    %v765 = vadd.f32 %v500, %v731
    %v766 = vadd.f32 %v505, %v736
    %v767 = vadd.f32 %v510, %v741
    %v768 = vadd.f32 %v515, %v746
    %v769 = vadd.f32 %v520, %v751
    %v770 = vrot.slane %v76, 3
    %v771 = vrot.slane %v77, 3
    %v772 = vrot.slane %v78, 3
    %v773 = vrot.slane %v79, 3
    %v774 = vrot.slane %v80, 3
    %v775 = vrot.slane %v81, 3
    %v776 = vrot.slane %v82, 3
    %v777 = vrot.slane %v83, 3
    %v778 = vrot.slane %v84, 3
    %v779 = vrot.slane %v85, 3
    %v780 = vrot.slane %v86, 3
    %v781 = vrot.slane %v87, 3
    %v782 = vrot.slane %v88, 3
    %v783 = vrot.slane %v89, 3
    %v784 = vrot.slane %v90, 3
    %v785 = vrot.slane %v91, 3
    %vm786 = vcmp.lt.s32.totalorder %v113, 5
    %v787 = vsel %vm786, %v784, %v785
    %v788 = vsel %vm786, %v783, %v784
    %v789 = vsel %vm786, %v782, %v783
    %v790 = vsel %vm786, %v781, %v782
    %v791 = vsel %vm786, %v780, %v781
    %v792 = vsel %vm786, %v779, %v780
    %v793 = vsel %vm786, %v778, %v779
    %v794 = vsel %vm786, %v777, %v778
    %v795 = vsel %vm786, %v776, %v777
    %v796 = vsel %vm786, %v775, %v776
    %v797 = vsel %vm786, %v774, %v775
    %v798 = vsel %vm786, %v773, %v774
    %v799 = vsel %vm786, %v772, %v773
    %v800 = vsel %vm786, %v771, %v772
    %v801 = vsel %vm786, %v770, %v771
    %v802 = vsel %vm786, %v785, %v770
    %s803 = scalar_lea.vmem [#allocation5], 96
    %v804 = vld [vmem:[%s803] sm:$0xff]
    %v805 = vld [vmem:[%s803 + $0x8] sm:$0xff]
    %v806 = vld [vmem:[%s803 + $0x10] sm:$0xff]
    %v807 = vld [vmem:[%s803 + $0x18] sm:$0xff]
    %v809 = vsel %vm136, %v801, 0
    %v812 = vsel %vm136, %v800, 0
    %v815 = vsel %vm136, %v799, 0
    %v818 = vsel %vm136, %v798, 0
    %v821 = vsel %vm136, %v797, 0
    %v824 = vsel %vm136, %v796, 0
    %v827 = vsel %vm136, %v795, 0
    %v830 = vsel %vm136, %v794, 0
    %v833 = vsel %vm136, %v793, 0
    %v836 = vsel %vm136, %v792, 0
    %v839 = vsel %vm136, %v791, 0
    %v842 = vsel %vm136, %v790, 0
    %v845 = vsel %vm136, %v789, 0
    %v848 = vsel %vm136, %v788, 0
    %v851 = vsel %vm136, %v787, 0
    %v854 = vsel %vm136, %v802, 0
    %856 = vmatprep.subr.mxu0 0.0
    %857 = vmatpush1.msra.mxu0 %v804
    %858 = vmatprep.subr.mxu0 0.0
    %859 = vmatpush1.msra.mxu0 %v805
    %860 = vmatprep.subr.mxu0 0.0
    %861 = vmatpush1.msra.mxu0 %v806
    %862 = vmatprep.subr.mxu0 0.0
    %863 = vmatpush1.msra.mxu0 %v807
    %864 = vmatprep.subr.mxu0 0.0
    %865 = vmatpush1.msra.mxu0 0.0
    %866 = vmatprep.subr.mxu0 0.0
    %867 = vmatpush1.msra.mxu0 0.0
    %868 = vmatprep.subr.mxu0 0.0
    %869 = vmatpush1.msra.mxu0 0.0
    %870 = vmatprep.subr.mxu0 0.0
    %871 = vmatpush1.msra.mxu0 0.0
    %872 = vmatprep.subr.mxu0 0.0
    %873 = vmatpush1.msra.mxu0 0.0
    %874 = vmatprep.subr.mxu0 0.0
    %875 = vmatpush1.msra.mxu0 0.0
    %876 = vmatprep.subr.mxu0 0.0
    %877 = vmatpush1.msra.mxu0 0.0
    %878 = vmatprep.subr.mxu0 0.0
    %879 = vmatpush1.msra.mxu0 0.0
    %880 = vmatprep.subr.mxu0 0.0
    %881 = vmatpush1.msra.mxu0 0.0
    %882 = vmatprep.subr.mxu0 0.0
    %883 = vmatpush1.msra.mxu0 0.0
    %884 = vmatprep.subr.mxu0 0.0
    %885 = vmatpush1.msra.mxu0 0.0
    %886 = vmatprep.subr.mxu0 0.0
    %887 = vmatpush1.msra.mxu0 0.0
    %888 = vmatprep.subr.mxu0 0.0
    %889 = vmatpush1.msra.mxu0 0.0
    %890 = vmatprep.subr.mxu0 0.0
    %891 = vmatpush1.msra.mxu0 0.0
    %892 = vmatprep.subr.mxu0 0.0
    %893 = vmatpush1.msra.mxu0 0.0
    %894 = vmatprep.subr.mxu0 0.0
    %895 = vmatpush1.msra.mxu0 0.0
    %896 = vmatprep.subr.mxu0 0.0
    %897 = vmatpush1.msra.mxu0 0.0
    %898 = vmatprep.subr.mxu0 0.0
    %899 = vmatpush1.msra.mxu0 0.0
    %900 = vmatprep.subr.mxu0 0.0
    %901 = vmatpush1.msra.mxu0 0.0
    %902 = vmatprep.subr.mxu0 0.0
    %903 = vmatpush1.msra.mxu0 0.0
    %904 = vmatprep.subr.mxu0 0.0
    %905 = vmatpush1.msra.mxu0 0.0
    %906 = vmatprep.subr.mxu0 0.0
    %907 = vmatpush1.msra.mxu0 0.0
    %908 = vmatprep.subr.mxu0 0.0
    %909 = vmatpush1.msra.mxu0 0.0
    %910 = vmatprep.subr.mxu0 0.0
    %911 = vmatpush1.msra.mxu0 0.0
    %912 = vmatprep.subr.mxu0 0.0
    %913 = vmatpush1.msra.mxu0 0.0
    %914 = vmatprep.subr.mxu0 0.0
    %915 = vmatpush1.msra.mxu0 0.0
    %916 = vmatprep.subr.mxu0 0.0
    %917 = vmatpush1.msra.mxu0 0.0
    %918 = vmatprep.subr.mxu0 0.0
    %919 = vmatpush1.msra.mxu0 0.0
    %920 = vmatprep.mubr.f32.mxu0 0.0
    %921 = vmatmul.mubr.f32.gmra.mrb[0].mxu0 %v809
    %v922 = vpop.f32.mrb[0].mxu0
    %v923 = vadd.f32 0.0, %v922
    %v924 = vpop.f32.mrb[0].mxu0
    %925 = vmatprep.mubr.f32.mxu0 0.0
    %926 = vmatmul.mubr.f32.gmra.mrb[0].mxu0 %v812
    %v927 = vpop.f32.mrb[0].mxu0
    %v928 = vadd.f32 0.0, %v927
    %v929 = vpop.f32.mrb[0].mxu0
    %930 = vmatprep.mubr.f32.mxu0 0.0
    %931 = vmatmul.mubr.f32.gmra.mrb[0].mxu0 %v815
    %v932 = vpop.f32.mrb[0].mxu0
    %v933 = vadd.f32 0.0, %v932
    %v934 = vpop.f32.mrb[0].mxu0
    %935 = vmatprep.mubr.f32.mxu0 0.0
    %936 = vmatmul.mubr.f32.gmra.mrb[0].mxu0 %v818
    %v937 = vpop.f32.mrb[0].mxu0
    %v938 = vadd.f32 0.0, %v937
    %v939 = vpop.f32.mrb[0].mxu0
    %940 = vmatprep.mubr.f32.mxu0 0.0
    %941 = vmatmul.mubr.f32.gmra.mrb[0].mxu0 %v821
    %v942 = vpop.f32.mrb[0].mxu0
    %v943 = vadd.f32 0.0, %v942
    %v944 = vpop.f32.mrb[0].mxu0
    %945 = vmatprep.mubr.f32.mxu0 0.0
    %946 = vmatmul.mubr.f32.gmra.mrb[0].mxu0 %v824
    %v947 = vpop.f32.mrb[0].mxu0
    %v948 = vadd.f32 0.0, %v947
    %v949 = vpop.f32.mrb[0].mxu0
    %950 = vmatprep.mubr.f32.mxu0 0.0
    %951 = vmatmul.mubr.f32.gmra.mrb[0].mxu0 %v827
    %v952 = vpop.f32.mrb[0].mxu0
    %v953 = vadd.f32 0.0, %v952
    %v954 = vpop.f32.mrb[0].mxu0
    %955 = vmatprep.mubr.f32.mxu0 0.0
    %956 = vmatmul.mubr.f32.gmra.mrb[0].mxu0 %v830
    %v957 = vpop.f32.mrb[0].mxu0
    %v958 = vadd.f32 0.0, %v957
    %v959 = vpop.f32.mrb[0].mxu0
    %960 = vmatprep.mubr.f32.mxu0 0.0
    %961 = vmatmul.mubr.f32.gmra.mrb[0].mxu0 %v833
    %v962 = vpop.f32.mrb[0].mxu0
    %v963 = vadd.f32 0.0, %v962
    %v964 = vpop.f32.mrb[0].mxu0
    %965 = vmatprep.mubr.f32.mxu0 0.0
    %966 = vmatmul.mubr.f32.gmra.mrb[0].mxu0 %v836
    %v967 = vpop.f32.mrb[0].mxu0
    %v968 = vadd.f32 0.0, %v967
    %v969 = vpop.f32.mrb[0].mxu0
    %970 = vmatprep.mubr.f32.mxu0 0.0
    %971 = vmatmul.mubr.f32.gmra.mrb[0].mxu0 %v839
    %v972 = vpop.f32.mrb[0].mxu0
    %v973 = vadd.f32 0.0, %v972
    %v974 = vpop.f32.mrb[0].mxu0
    %975 = vmatprep.mubr.f32.mxu0 0.0
    %976 = vmatmul.mubr.f32.gmra.mrb[0].mxu0 %v842
    %v977 = vpop.f32.mrb[0].mxu0
    %v978 = vadd.f32 0.0, %v977
    %v979 = vpop.f32.mrb[0].mxu0
    %980 = vmatprep.mubr.f32.mxu0 0.0
    %981 = vmatmul.mubr.f32.gmra.mrb[0].mxu0 %v845
    %v982 = vpop.f32.mrb[0].mxu0
    %v983 = vadd.f32 0.0, %v982
    %v984 = vpop.f32.mrb[0].mxu0
    %985 = vmatprep.mubr.f32.mxu0 0.0
    %986 = vmatmul.mubr.f32.gmra.mrb[0].mxu0 %v848
    %v987 = vpop.f32.mrb[0].mxu0
    %v988 = vadd.f32 0.0, %v987
    %v989 = vpop.f32.mrb[0].mxu0
    %990 = vmatprep.mubr.f32.mxu0 0.0
    %991 = vmatmul.mubr.f32.gmra.mrb[0].mxu0 %v851
    %v992 = vpop.f32.mrb[0].mxu0
    %v993 = vadd.f32 0.0, %v992
    %v994 = vpop.f32.mrb[0].mxu0
    %995 = vmatprep.mubr.f32.mxu0 0.0
    %996 = vmatmul.mubr.f32.gmra.mrb[0].mxu0 %v854
    %v997 = vpop.f32.mrb[0].mxu0
    %v998 = vadd.f32 0.0, %v997
    %v999 = vpop.f32.mrb[0].mxu0
    %1000 = vdwg.mxu0
    %v1001 = vadd.f32 %v754, %v923
    %v1002 = vadd.f32 %v755, %v928
    %v1003 = vadd.f32 %v756, %v933
    %v1004 = vadd.f32 %v757, %v938
    %v1005 = vadd.f32 %v758, %v943
    %v1006 = vadd.f32 %v759, %v948
    %v1007 = vadd.f32 %v760, %v953
    %v1008 = vadd.f32 %v761, %v958
    %v1009 = vadd.f32 %v762, %v963
    %v1010 = vadd.f32 %v763, %v968
    %v1011 = vadd.f32 %v764, %v973
    %v1012 = vadd.f32 %v765, %v978
    %v1013 = vadd.f32 %v766, %v983
    %v1014 = vadd.f32 %v767, %v988
    %v1015 = vadd.f32 %v768, %v993
    %v1016 = vadd.f32 %v769, %v998
    %v1017 = vrot.slane %v76, 4
    %v1018 = vrot.slane %v77, 4
    %v1019 = vrot.slane %v78, 4
    %v1020 = vrot.slane %v79, 4
    %v1021 = vrot.slane %v80, 4
    %v1022 = vrot.slane %v81, 4
    %v1023 = vrot.slane %v82, 4
    %v1024 = vrot.slane %v83, 4
    %v1025 = vrot.slane %v84, 4
    %v1026 = vrot.slane %v85, 4
    %v1027 = vrot.slane %v86, 4
    %v1028 = vrot.slane %v87, 4
    %v1029 = vrot.slane %v88, 4
    %v1030 = vrot.slane %v89, 4
    %v1031 = vrot.slane %v90, 4
    %v1032 = vrot.slane %v91, 4
    %vm1033 = vcmp.lt.s32.totalorder %v113, 4
    %v1034 = vsel %vm1033, %v1031, %v1032
    %v1035 = vsel %vm1033, %v1030, %v1031
    %v1036 = vsel %vm1033, %v1029, %v1030
    %v1037 = vsel %vm1033, %v1028, %v1029
    %v1038 = vsel %vm1033, %v1027, %v1028
    %v1039 = vsel %vm1033, %v1026, %v1027
    %v1040 = vsel %vm1033, %v1025, %v1026
    %v1041 = vsel %vm1033, %v1024, %v1025
    %v1042 = vsel %vm1033, %v1023, %v1024
    %v1043 = vsel %vm1033, %v1022, %v1023
    %v1044 = vsel %vm1033, %v1021, %v1022
    %v1045 = vsel %vm1033, %v1020, %v1021
    %v1046 = vsel %vm1033, %v1019, %v1020
    %v1047 = vsel %vm1033, %v1018, %v1019
    %v1048 = vsel %vm1033, %v1017, %v1018
    %v1049 = vsel %vm1033, %v1032, %v1017
    %s1050 = scalar_lea.vmem [#allocation5], 128
    %v1051 = vld [vmem:[%s1050] sm:$0xff]
    %v1052 = vld [vmem:[%s1050 + $0x8] sm:$0xff]
    %v1053 = vld [vmem:[%s1050 + $0x10] sm:$0xff]
    %v1054 = vld [vmem:[%s1050 + $0x18] sm:$0xff]
    %v1056 = vsel %vm136, %v1048, 0
    %v1059 = vsel %vm136, %v1047, 0
    %v1062 = vsel %vm136, %v1046, 0
    %v1065 = vsel %vm136, %v1045, 0
    %v1068 = vsel %vm136, %v1044, 0
    %v1071 = vsel %vm136, %v1043, 0
    %v1074 = vsel %vm136, %v1042, 0
    %v1077 = vsel %vm136, %v1041, 0
    %v1080 = vsel %vm136, %v1040, 0
    %v1083 = vsel %vm136, %v1039, 0
    %v1086 = vsel %vm136, %v1038, 0
    %v1089 = vsel %vm136, %v1037, 0
    %v1092 = vsel %vm136, %v1036, 0
    %v1095 = vsel %vm136, %v1035, 0
    %v1098 = vsel %vm136, %v1034, 0
    %v1101 = vsel %vm136, %v1049, 0
    %1103 = vmatprep.subr.mxu0 0.0
    %1104 = vmatpush1.msra.mxu0 %v1051
    %1105 = vmatprep.subr.mxu0 0.0
    %1106 = vmatpush1.msra.mxu0 %v1052
    %1107 = vmatprep.subr.mxu0 0.0
    %1108 = vmatpush1.msra.mxu0 %v1053
    %1109 = vmatprep.subr.mxu0 0.0
    %1110 = vmatpush1.msra.mxu0 %v1054
    %1111 = vmatprep.subr.mxu0 0.0
    %1112 = vmatpush1.msra.mxu0 0.0
    %1113 = vmatprep.subr.mxu0 0.0
    %1114 = vmatpush1.msra.mxu0 0.0
    %1115 = vmatprep.subr.mxu0 0.0
    %1116 = vmatpush1.msra.mxu0 0.0
    %1117 = vmatprep.subr.mxu0 0.0
    %1118 = vmatpush1.msra.mxu0 0.0
    %1119 = vmatprep.subr.mxu0 0.0
    %1120 = vmatpush1.msra.mxu0 0.0
    %1121 = vmatprep.subr.mxu0 0.0
    %1122 = vmatpush1.msra.mxu0 0.0
    %1123 = vmatprep.subr.mxu0 0.0
    %1124 = vmatpush1.msra.mxu0 0.0
    %1125 = vmatprep.subr.mxu0 0.0
    %1126 = vmatpush1.msra.mxu0 0.0
    %1127 = vmatprep.subr.mxu0 0.0
    %1128 = vmatpush1.msra.mxu0 0.0
    %1129 = vmatprep.subr.mxu0 0.0
    %1130 = vmatpush1.msra.mxu0 0.0
    %1131 = vmatprep.subr.mxu0 0.0
    %1132 = vmatpush1.msra.mxu0 0.0
    %1133 = vmatprep.subr.mxu0 0.0
    %1134 = vmatpush1.msra.mxu0 0.0
    %1135 = vmatprep.subr.mxu0 0.0
    %1136 = vmatpush1.msra.mxu0 0.0
    %1137 = vmatprep.subr.mxu0 0.0
    %1138 = vmatpush1.msra.mxu0 0.0
    %1139 = vmatprep.subr.mxu0 0.0
    %1140 = vmatpush1.msra.mxu0 0.0
    %1141 = vmatprep.subr.mxu0 0.0
    %1142 = vmatpush1.msra.mxu0 0.0
    %1143 = vmatprep.subr.mxu0 0.0
    %1144 = vmatpush1.msra.mxu0 0.0
    %1145 = vmatprep.subr.mxu0 0.0
    %1146 = vmatpush1.msra.mxu0 0.0
    %1147 = vmatprep.subr.mxu0 0.0
    %1148 = vmatpush1.msra.mxu0 0.0
    %1149 = vmatprep.subr.mxu0 0.0
    %1150 = vmatpush1.msra.mxu0 0.0
    %1151 = vmatprep.subr.mxu0 0.0
    %1152 = vmatpush1.msra.mxu0 0.0
    %1153 = vmatprep.subr.mxu0 0.0
    %1154 = vmatpush1.msra.mxu0 0.0
    %1155 = vmatprep.subr.mxu0 0.0
    %1156 = vmatpush1.msra.mxu0 0.0
    %1157 = vmatprep.subr.mxu0 0.0
    %1158 = vmatpush1.msra.mxu0 0.0
    %1159 = vmatprep.subr.mxu0 0.0
    %1160 = vmatpush1.msra.mxu0 0.0
    %1161 = vmatprep.subr.mxu0 0.0
    %1162 = vmatpush1.msra.mxu0 0.0
    %1163 = vmatprep.subr.mxu0 0.0
    %1164 = vmatpush1.msra.mxu0 0.0
    %1165 = vmatprep.subr.mxu0 0.0
    %1166 = vmatpush1.msra.mxu0 0.0
    %1167 = vmatprep.mubr.f32.mxu0 0.0
    %1168 = vmatmul.mubr.f32.gmra.mrb[0].mxu0 %v1056
    %v1169 = vpop.f32.mrb[0].mxu0
    %v1170 = vadd.f32 0.0, %v1169
    %v1171 = vpop.f32.mrb[0].mxu0
    %1172 = vmatprep.mubr.f32.mxu0 0.0
    %1173 = vmatmul.mubr.f32.gmra.mrb[0].mxu0 %v1059
    %v1174 = vpop.f32.mrb[0].mxu0
    %v1175 = vadd.f32 0.0, %v1174
    %v1176 = vpop.f32.mrb[0].mxu0
    %1177 = vmatprep.mubr.f32.mxu0 0.0
    %1178 = vmatmul.mubr.f32.gmra.mrb[0].mxu0 %v1062
    %v1179 = vpop.f32.mrb[0].mxu0
    %v1180 = vadd.f32 0.0, %v1179
    %v1181 = vpop.f32.mrb[0].mxu0
    %1182 = vmatprep.mubr.f32.mxu0 0.0
    %1183 = vmatmul.mubr.f32.gmra.mrb[0].mxu0 %v1065
    %v1184 = vpop.f32.mrb[0].mxu0
    %v1185 = vadd.f32 0.0, %v1184
    %v1186 = vpop.f32.mrb[0].mxu0
    %1187 = vmatprep.mubr.f32.mxu0 0.0
    %1188 = vmatmul.mubr.f32.gmra.mrb[0].mxu0 %v1068
    %v1189 = vpop.f32.mrb[0].mxu0
    %v1190 = vadd.f32 0.0, %v1189
    %v1191 = vpop.f32.mrb[0].mxu0
    %1192 = vmatprep.mubr.f32.mxu0 0.0
    %1193 = vmatmul.mubr.f32.gmra.mrb[0].mxu0 %v1071
    %v1194 = vpop.f32.mrb[0].mxu0
    %v1195 = vadd.f32 0.0, %v1194
    %v1196 = vpop.f32.mrb[0].mxu0
    %1197 = vmatprep.mubr.f32.mxu0 0.0
    %1198 = vmatmul.mubr.f32.gmra.mrb[0].mxu0 %v1074
    %v1199 = vpop.f32.mrb[0].mxu0
    %v1200 = vadd.f32 0.0, %v1199
    %v1201 = vpop.f32.mrb[0].mxu0
    %1202 = vmatprep.mubr.f32.mxu0 0.0
    %1203 = vmatmul.mubr.f32.gmra.mrb[0].mxu0 %v1077
    %v1204 = vpop.f32.mrb[0].mxu0
    %v1205 = vadd.f32 0.0, %v1204
    %v1206 = vpop.f32.mrb[0].mxu0
    %1207 = vmatprep.mubr.f32.mxu0 0.0
    %1208 = vmatmul.mubr.f32.gmra.mrb[0].mxu0 %v1080
    %v1209 = vpop.f32.mrb[0].mxu0
    %v1210 = vadd.f32 0.0, %v1209
    %v1211 = vpop.f32.mrb[0].mxu0
    %1212 = vmatprep.mubr.f32.mxu0 0.0
    %1213 = vmatmul.mubr.f32.gmra.mrb[0].mxu0 %v1083
    %v1214 = vpop.f32.mrb[0].mxu0
    %v1215 = vadd.f32 0.0, %v1214
    %v1216 = vpop.f32.mrb[0].mxu0
    %1217 = vmatprep.mubr.f32.mxu0 0.0
    %1218 = vmatmul.mubr.f32.gmra.mrb[0].mxu0 %v1086
    %v1219 = vpop.f32.mrb[0].mxu0
    %v1220 = vadd.f32 0.0, %v1219
    %v1221 = vpop.f32.mrb[0].mxu0
    %1222 = vmatprep.mubr.f32.mxu0 0.0
    %1223 = vmatmul.mubr.f32.gmra.mrb[0].mxu0 %v1089
    %v1224 = vpop.f32.mrb[0].mxu0
    %v1225 = vadd.f32 0.0, %v1224
    %v1226 = vpop.f32.mrb[0].mxu0
    %1227 = vmatprep.mubr.f32.mxu0 0.0
    %1228 = vmatmul.mubr.f32.gmra.mrb[0].mxu0 %v1092
    %v1229 = vpop.f32.mrb[0].mxu0
    %v1230 = vadd.f32 0.0, %v1229
    %v1231 = vpop.f32.mrb[0].mxu0
    %1232 = vmatprep.mubr.f32.mxu0 0.0
    %1233 = vmatmul.mubr.f32.gmra.mrb[0].mxu0 %v1095
    %v1234 = vpop.f32.mrb[0].mxu0
    %v1235 = vadd.f32 0.0, %v1234
    %v1236 = vpop.f32.mrb[0].mxu0
    %1237 = vmatprep.mubr.f32.mxu0 0.0
    %1238 = vmatmul.mubr.f32.gmra.mrb[0].mxu0 %v1098
    %v1239 = vpop.f32.mrb[0].mxu0
    %v1240 = vadd.f32 0.0, %v1239
    %v1241 = vpop.f32.mrb[0].mxu0
    %1242 = vmatprep.mubr.f32.mxu0 0.0
    %1243 = vmatmul.mubr.f32.gmra.mrb[0].mxu0 %v1101
    %v1244 = vpop.f32.mrb[0].mxu0
    %v1245 = vadd.f32 0.0, %v1244
    %v1246 = vpop.f32.mrb[0].mxu0
    %1247 = vdwg.mxu0
    %v1248 = vadd.f32 %v1001, %v1170
    %v1249 = vadd.f32 %v1002, %v1175
    %v1250 = vadd.f32 %v1003, %v1180
    %v1251 = vadd.f32 %v1004, %v1185
    %v1252 = vadd.f32 %v1005, %v1190
    %v1253 = vadd.f32 %v1006, %v1195
    %v1254 = vadd.f32 %v1007, %v1200
    %v1255 = vadd.f32 %v1008, %v1205
    %v1256 = vadd.f32 %v1009, %v1210
    %v1257 = vadd.f32 %v1010, %v1215
    %v1258 = vadd.f32 %v1011, %v1220
    %v1259 = vadd.f32 %v1012, %v1225
    %v1260 = vadd.f32 %v1013, %v1230
    %v1261 = vadd.f32 %v1014, %v1235
    %v1262 = vadd.f32 %v1015, %v1240
    %v1263 = vadd.f32 %v1016, %v1245
    %v1264 = vld [vmem:[#allocation7] sm:$0xff]
    %v1265 = vld [vmem:[#allocation7 + $0x8] sm:$0xff]
    %v1266 = vadd.f32 %v1248, %v1264
    %v1267 = vadd.f32 %v1249, %v1265
    %v1268 = vadd.f32 %v1250, %v1264
    %v1269 = vadd.f32 %v1251, %v1265
    %v1270 = vadd.f32 %v1252, %v1264
    %v1271 = vadd.f32 %v1253, %v1265
    %v1272 = vadd.f32 %v1254, %v1264
    %v1273 = vadd.f32 %v1255, %v1265
    %v1274 = vadd.f32 %v1256, %v1264
    %v1275 = vadd.f32 %v1257, %v1265
    %v1276 = vadd.f32 %v1258, %v1264
    %v1277 = vadd.f32 %v1259, %v1265
    %v1278 = vadd.f32 %v1260, %v1264
    %v1279 = vadd.f32 %v1261, %v1265
    %v1280 = vadd.f32 %v1262, %v1264
    %v1281 = vadd.f32 %v1263, %v1265
    %v1282 = vmax.f32 %v1266, %v1267
    %v1283 = vrot.slane %v1282, 4
    %v1284 = vmax.f32 %v1282, %v1283
    %v1285 = vrot.slane %v1284, 2
    %v1286 = vmax.f32 %v1284, %v1285
    %v1287 = vrot.slane %v1286, 1
    %v1288 = vmax.f32 %v1286, %v1287
    %v1289 = vmax.f32 %v1268, %v1269
    %v1290 = vrot.slane %v1289, 4
    %v1291 = vmax.f32 %v1289, %v1290
    %v1292 = vrot.slane %v1291, 2
    %v1293 = vmax.f32 %v1291, %v1292
    %v1294 = vrot.slane %v1293, 1
    %v1295 = vmax.f32 %v1293, %v1294
    %v1296 = vmax.f32 %v1270, %v1271
    %v1297 = vrot.slane %v1296, 4
    %v1298 = vmax.f32 %v1296, %v1297
    %v1299 = vrot.slane %v1298, 2
    %v1300 = vmax.f32 %v1298, %v1299
    %v1301 = vrot.slane %v1300, 1
    %v1302 = vmax.f32 %v1300, %v1301
    %v1303 = vmax.f32 %v1272, %v1273
    %v1304 = vrot.slane %v1303, 4
    %v1305 = vmax.f32 %v1303, %v1304
    %v1306 = vrot.slane %v1305, 2
    %v1307 = vmax.f32 %v1305, %v1306
    %v1308 = vrot.slane %v1307, 1
    %v1309 = vmax.f32 %v1307, %v1308
    %v1310 = vmax.f32 %v1274, %v1275
    %v1311 = vrot.slane %v1310, 4
    %v1312 = vmax.f32 %v1310, %v1311
    %v1313 = vrot.slane %v1312, 2
    %v1314 = vmax.f32 %v1312, %v1313
    %v1315 = vrot.slane %v1314, 1
    %v1316 = vmax.f32 %v1314, %v1315
    %v1317 = vmax.f32 %v1276, %v1277
    %v1318 = vrot.slane %v1317, 4
    %v1319 = vmax.f32 %v1317, %v1318
    %v1320 = vrot.slane %v1319, 2
    %v1321 = vmax.f32 %v1319, %v1320
    %v1322 = vrot.slane %v1321, 1
    %v1323 = vmax.f32 %v1321, %v1322
    %v1324 = vmax.f32 %v1278, %v1279
    %v1325 = vrot.slane %v1324, 4
    %v1326 = vmax.f32 %v1324, %v1325
    %v1327 = vrot.slane %v1326, 2
    %v1328 = vmax.f32 %v1326, %v1327
    %v1329 = vrot.slane %v1328, 1
    %v1330 = vmax.f32 %v1328, %v1329
    %v1331 = vmax.f32 %v1280, %v1281
    %v1332 = vrot.slane %v1331, 4
    %v1333 = vmax.f32 %v1331, %v1332
    %v1334 = vrot.slane %v1333, 2
    %v1335 = vmax.f32 %v1333, %v1334
    %v1336 = vrot.slane %v1335, 1
    %v1337 = vmax.f32 %v1335, %v1336
    %v1338 = vmax.f32 %v1288, 0.0
    %v1339 = vmax.f32 %v1295, 0.0
    %v1340 = vmax.f32 %v1302, 0.0
    %v1341 = vmax.f32 %v1309, 0.0
    %v1342 = vmax.f32 %v1316, 0.0
    %v1343 = vmax.f32 %v1323, 0.0
    %v1344 = vmax.f32 %v1330, 0.0
    %v1345 = vmax.f32 %v1337, 0.0
    %v1346 = vld [vmem:[#allocation8] sm:$0xff]
    %v1347 = vld [vmem:[#allocation8 + $0x8] sm:$0xff]
    %v1348 = vld [vmem:[#allocation8 + $0x10] sm:$0xff]
    %v1349 = vld [vmem:[#allocation8 + $0x18] sm:$0xff]
    %v1350 = vld [vmem:[#allocation8 + $0x20] sm:$0xff]
    %v1351 = vld [vmem:[#allocation8 + $0x28] sm:$0xff]
    %v1352 = vld [vmem:[#allocation8 + $0x30] sm:$0xff]
    %v1353 = vld [vmem:[#allocation8 + $0x38] sm:$0xff]
    %v1354 = vld [vmem:[#allocation8 + $0x40] sm:$0xff]
    %v1355 = vld [vmem:[#allocation8 + $0x48] sm:$0xff]
    %v1356 = vld [vmem:[#allocation8 + $0x50] sm:$0xff]
    %v1357 = vld [vmem:[#allocation8 + $0x58] sm:$0xff]
    %v1358 = vld [vmem:[#allocation8 + $0x60] sm:$0xff]
    %v1359 = vld [vmem:[#allocation8 + $0x68] sm:$0xff]
    %v1360 = vld [vmem:[#allocation8 + $0x70] sm:$0xff]
    %v1361 = vld [vmem:[#allocation8 + $0x78] sm:$0xff]
    %v1362 = vld [vmem:[%s4] sm:$0x1]
    %v1364 = vlaneseq
    %v1365 = vshrl.u32 %v1364, 7
    %v1366 = vsub.s32 0, %v1365
    %v1367 = vrot.slane %v1362, %v1366
    %vm1377 = vcmask 1041409
    %v1378 = vsel %vm1377, %v1339, %v1338
    %vm1379 = vcmask 1042434
    %v1380 = vsel %vm1379, %v1340, %v1378
    %vm1381 = vcmask 1043459
    %v1382 = vsel %vm1381, %v1341, %v1380
    %vm1383 = vcmask 1044484
    %v1384 = vsel %vm1383, %v1342, %v1382
    %vm1385 = vcmask 1045509
    %v1386 = vsel %vm1385, %v1343, %v1384
    %vm1387 = vcmask 1046534
    %v1388 = vsel %vm1387, %v1344, %v1386
    %vm1389 = vcmask 1047559
    %v1390 = vsel %vm1389, %v1345, %v1388
    %1392 = vmatprep.subr.mxu0 0.0
    %1393 = vmatpush1.msra.mxu0 %v1346
    %1394 = vmatprep.subr.mxu0 0.0
    %1395 = vmatpush1.msra.mxu0 %v1347
    %1396 = vmatprep.subr.mxu0 0.0
    %1397 = vmatpush1.msra.mxu0 %v1348
    %1398 = vmatprep.subr.mxu0 0.0
    %1399 = vmatpush1.msra.mxu0 %v1349
    %1400 = vmatprep.subr.mxu0 0.0
    %1401 = vmatpush1.msra.mxu0 %v1350
    %1402 = vmatprep.subr.mxu0 0.0
    %1403 = vmatpush1.msra.mxu0 %v1351
    %1404 = vmatprep.subr.mxu0 0.0
    %1405 = vmatpush1.msra.mxu0 %v1352
    %1406 = vmatprep.subr.mxu0 0.0
    %1407 = vmatpush1.msra.mxu0 %v1353
    %1408 = vmatprep.subr.mxu0 0.0
    %1409 = vmatpush1.msra.mxu0 %v1354
    %1410 = vmatprep.subr.mxu0 0.0
    %1411 = vmatpush1.msra.mxu0 %v1355
    %1412 = vmatprep.subr.mxu0 0.0
    %1413 = vmatpush1.msra.mxu0 %v1356
    %1414 = vmatprep.subr.mxu0 0.0
    %1415 = vmatpush1.msra.mxu0 %v1357
    %1416 = vmatprep.subr.mxu0 0.0
    %1417 = vmatpush1.msra.mxu0 %v1358
    %1418 = vmatprep.subr.mxu0 0.0
    %1419 = vmatpush1.msra.mxu0 %v1359
    %1420 = vmatprep.subr.mxu0 0.0
    %1421 = vmatpush1.msra.mxu0 %v1360
    %1422 = vmatprep.subr.mxu0 0.0
    %1423 = vmatpush1.msra.mxu0 %v1361
    %1424 = vmatprep.subr.mxu0 0.0
    %1425 = vmatpush1.msra.mxu0 0.0
    %1426 = vmatprep.subr.mxu0 0.0
    %1427 = vmatpush1.msra.mxu0 0.0
    %1428 = vmatprep.subr.mxu0 0.0
    %1429 = vmatpush1.msra.mxu0 0.0
    %1430 = vmatprep.subr.mxu0 0.0
    %1431 = vmatpush1.msra.mxu0 0.0
    %1432 = vmatprep.subr.mxu0 0.0
    %1433 = vmatpush1.msra.mxu0 0.0
    %1434 = vmatprep.subr.mxu0 0.0
    %1435 = vmatpush1.msra.mxu0 0.0
    %1436 = vmatprep.subr.mxu0 0.0
    %1437 = vmatpush1.msra.mxu0 0.0
    %1438 = vmatprep.subr.mxu0 0.0
    %1439 = vmatpush1.msra.mxu0 0.0
    %1440 = vmatprep.subr.mxu0 0.0
    %1441 = vmatpush1.msra.mxu0 0.0
    %1442 = vmatprep.subr.mxu0 0.0
    %1443 = vmatpush1.msra.mxu0 0.0
    %1444 = vmatprep.subr.mxu0 0.0
    %1445 = vmatpush1.msra.mxu0 0.0
    %1446 = vmatprep.subr.mxu0 0.0
    %1447 = vmatpush1.msra.mxu0 0.0
    %1448 = vmatprep.subr.mxu0 0.0
    %1449 = vmatpush1.msra.mxu0 0.0
    %1450 = vmatprep.subr.mxu0 0.0
    %1451 = vmatpush1.msra.mxu0 0.0
    %1452 = vmatprep.subr.mxu0 0.0
    %1453 = vmatpush1.msra.mxu0 0.0
    %1454 = vmatprep.subr.mxu0 0.0
    %1455 = vmatpush1.msra.mxu0 0.0
    %1456 = vmatprep.mubr.f32.mxu0 0.0
    %1457 = vmatmul.mubr.f32.gmra.mrb[0].mxu0 %v1390
    %v1458 = vpop.f32.mrb[0].mxu0
    %v1459 = vadd.f32 %v1367, %v1458
    %v1460 = vpop.f32.mrb[0].mxu0
    %1461 = vdwg.mxu0
    %1462 = vst [vmem:[#allocation10] sm:$0xff] %v1459
    // Predicated region
    $region38: #{tpu_custom_call.1} parent=1 // pred_check
      _
    $region39: #{tpu_custom_call.1} parent=1 // pred_check_branch
      %1464 = sbr.rel (0) target = $region41
    $region40: #{tpu_custom_call.1} parent=1 // pred_region
      %s1466 = ssub.s32 128, 128
      %1467 = vsyncadd [#allocation4], %s1466
      %s1469 = sshll.u32 [#allocation10], 4
      %s1470 = int_to_ptr.vmem [resolvable:$true] %s1469
      %1472 = dma.vmem_to_hbm [thread:$0]  %s1470, 128, %s5, [#allocation4]
    $region41: #{tpu_custom_call.1} parent=1 // pred_fallthru
      _
    // Predicated region
    $region42: #{tpu_custom_call.1} parent=1 // pred_check
      _
    $region43: #{tpu_custom_call.1} parent=1 // pred_check_branch
      %1474 = sbr.rel (0) target = $region45
    $region44: #{tpu_custom_call.1} parent=1 // pred_region
      %1475 = dma.done [#allocation4], 128
    $region45: #{tpu_custom_call.1} parent=1 // pred_fallthru
      _
    %1476 = vsyncpa [#allocation3], 1
    %1477 = vsyncpa [#allocation6], 1
    %1478 = vsyncpa [#allocation9], 1
    %1479 = vsyncpa [#allocation4], 1

</llo_original>
